<compile_context>
chip_gen: v5e
topology: v5e:2x2
jax: 0.10.0
libtpu: 0.0.40
codegen_flags: <defaults>
</compile_context>

<pallas_src>
import jax
import jax.numpy as jnp
from jax.experimental import pallas as pl
from jax.experimental.pallas import tpu as pltpu


_LANE = 128
_SUBLANE = 8
_NEG_BIAS = -1e30  # bias on padded vocab columns; exp() underflows to exactly 0


def _round_up(x, m):
    return ((x + m - 1) // m) * m


def ngram_kernel(idx_ref, emb_ref, w1_ref, b1_ref, w2_ref, b2_ref, o_ref,
                 x_sc, h_sc, m_sc, l_sc, logits_sc):
    # idx_ref:   VMEM (tile_b, C)        int32 token indices for this batch tile
    # emb_ref:   VMEM (V_pad, E)         embedding table (grid-invariant)
    # w1_ref:    VMEM (CE_pad, H_pad)    linear1 weight (grid-invariant)
    # b1_ref:    VMEM (1, H_pad)         f32
    # w2_ref:    VMEM (H_pad, tile_v)    streamed vocab tile of linear2 weight
    # b2_ref:    VMEM (1, tile_v)        f32; padded columns hold _NEG_BIAS
    # o_ref:     VMEM (tile_b, V_pad)    log-probs (resident across vocab axis)
    # x_sc:      VMEM (tile_b, CE_pad)   flattened context embeddings
    # h_sc:      VMEM (tile_b, H_pad)    post-ReLU hidden
    # m_sc/l_sc: VMEM (tile_b, 1)        online-logsumexp running max / sum
    # logits_sc: VMEM (nj, tile_b, tile_v) staged raw logits
    j = pl.program_id(1)
    nj = pl.num_programs(1)
    tile_b = x_sc.shape[0]
    n_ctx = idx_ref.shape[1]
    v_rows, emb_dim = emb_ref.shape
    matmul_dtype = w1_ref.dtype

    # ---- Prologue (first vocab step of this batch tile): fused embedding
    # gather (one one-hot MXU matmul per context slot) + linear1 + ReLU.
    @pl.when(j == 0)
    def _prologue():
        x_sc[...] = jnp.zeros(x_sc.shape, x_sc.dtype)      # zero K padding
        emb = emb_ref[...].astype(matmul_dtype)
        idx = idx_ref[...]                                  # (tile_b, C) int32
        col = jax.lax.broadcasted_iota(jnp.int32, (tile_b, v_rows), 1)
        for c in range(n_ctx):                              # C is tiny & static
            onehot = (idx[:, c:c + 1] == col).astype(matmul_dtype)
            piece = jnp.dot(onehot, emb, preferred_element_type=jnp.float32)
            x_sc[:, c * emb_dim:(c + 1) * emb_dim] = piece.astype(x_sc.dtype)
        h = jnp.dot(x_sc[...], w1_ref[...],
                    preferred_element_type=jnp.float32) + b1_ref[...]
        h_sc[...] = jnp.maximum(h, 0.0).astype(h_sc.dtype)
        m_sc[...] = jnp.full(m_sc.shape, -jnp.inf, m_sc.dtype)
        l_sc[...] = jnp.zeros(l_sc.shape, l_sc.dtype)

    # ---- Streamed vocab tile: linear2 on this (H_pad, tile_v) block of w2,
    # online logsumexp update, stage raw logits for the epilogue.
    logits = jnp.dot(h_sc[...], w2_ref[...],
                     preferred_element_type=jnp.float32) + b2_ref[...]
    m_new = jnp.maximum(m_sc[...], jnp.max(logits, axis=-1, keepdims=True))
    l_sc[...] = (l_sc[...] * jnp.exp(m_sc[...] - m_new)
                 + jnp.sum(jnp.exp(logits - m_new), axis=-1, keepdims=True))
    m_sc[...] = m_new
    logits_sc[j] = logits

    # ---- Epilogue (last vocab step): normalize and emit the full-width,
    # lane-dense output block with static (unmasked) column stores.
    @pl.when(j == nj - 1)
    def _epilogue():
        lse = m_sc[...] + jnp.log(l_sc[...])
        n_vt, _, tile_v = logits_sc.shape
        for jj in range(n_vt):                              # static; nj small
            o_ref[:, jj * tile_v:(jj + 1) * tile_v] = (
                logits_sc[jj] - lse).astype(o_ref.dtype)


def ngram_forward(inputs, emb_table, w1, b1, w2, b2, *, batch_size,
                  matmul_dtype=jnp.float32, out_dtype=jnp.float32):
    """Forward pass matching NGramLanguageModeler.forward.

    inputs:    (B, C) int32 token indices
    emb_table: (V, E) float32
    w1:        (C*E, H) float32   (PyTorch linear1.weight.T)
    b1:        (H,)     float32
    w2:        (H, V)   float32   (PyTorch linear2.weight.T)
    b2:        (V,)     float32
    returns:   (B, V)   out_dtype log-probabilities
    """
    B = batch_size
    C = inputs.shape[1]
    V, E = emb_table.shape
    CE, H = w1.shape
    assert CE == C * E and w2.shape == (H, V)
    assert b1.shape == (H,) and b2.shape == (V,)

    md = jnp.dtype(matmul_dtype)
    od = jnp.dtype(out_dtype)

    H_pad = _round_up(H, _LANE)
    V_pad = _round_up(V, _LANE)
    CE_pad = _round_up(CE, _LANE)

    # Batch tile: big batches -> 128-row tiles; mid-sized batches split in two
    # so the "parallel" grid axis can feed both v7x TensorCores; tiny batches
    # stay one 8-aligned tile (launch-overhead bound anyway).
    B8 = _round_up(B, _SUBLANE)
    if B8 >= 2 * _LANE:
        tile_b = _LANE
    elif B8 >= 16 and B8 % 16 == 0:
        tile_b = B8 // 2
    else:
        tile_b = B8
    B_pad = _round_up(B, tile_b)
    nb = B_pad // tile_b

    # Vocab tile for the streamed w2 / b2 blocks (multiple of 128, divides V_pad).
    if V_pad <= 512:
        tile_v = V_pad
    elif V_pad % 512 == 0:
        tile_v = 512
    elif V_pad % 256 == 0:
        tile_v = 256
    else:
        tile_v = _LANE
    nj = V_pad // tile_v

    # Pad + (optionally) down-cast weights.  Bias / softmax math stays f32.
    # Padded vocab columns of b2 carry a huge negative bias so they never win
    # the max and exp() underflows to exactly 0 in the logsumexp.
    emb_p = jnp.pad(emb_table, ((0, V_pad - V), (0, 0))).astype(md)
    w1_p = jnp.pad(w1, ((0, CE_pad - CE), (0, H_pad - H))).astype(md)
    b1_p = jnp.pad(b1, (0, H_pad - H)).reshape(1, H_pad).astype(jnp.float32)
    w2_p = jnp.pad(w2, ((0, H_pad - H), (0, V_pad - V))).astype(md)
    b2_p = jnp.pad(b2, (0, V_pad - V),
                   constant_values=_NEG_BIAS).reshape(1, V_pad).astype(jnp.float32)
    idx_p = jnp.pad(inputs.astype(jnp.int32), ((0, B_pad - B), (0, 0)))

    msz, osz = md.itemsize, od.itemsize
    cost = pl.CostEstimate(
        flops=int(2 * B_pad * (C * V_pad * E + CE_pad * H_pad + H_pad * V_pad)
                  + 6 * B_pad * V_pad),
        transcendentals=int(B_pad * (V_pad + 1)),
        bytes_accessed=int(idx_p.size * 4 + emb_p.size * msz + w1_p.size * msz
                           + b1_p.size * 4
                           + nb * (w2_p.size * msz + b2_p.size * 4)
                           + B_pad * V_pad * osz),
    )

    # Explicit scoped-VMEM budget (defaults: 16 MiB v5e / 32 MiB v6e+v7x).
    vmem_need = (
        2 * (emb_p.size * msz + w1_p.size * msz + b1_p.size * 4)      # invariant
        + 2 * (H_pad * tile_v * msz + tile_v * 4 + tile_b * C * 4)    # streamed
        + 2 * tile_b * V_pad * osz                                    # out block
        + tile_b * (CE_pad + H_pad) * msz + 2 * tile_b * 4            # x,h,m,l
        + nj * tile_b * tile_v * 4)                                   # logits
    vmem_limit = int(min(max(2 * vmem_need, 32 << 20), 100 << 20))

    def build(single_buffer_invariants):
        inv = (dict(pipeline_mode=pl.Buffered(1))
               if single_buffer_invariants else {})
        grid_spec = pltpu.PrefetchScalarGridSpec(
            num_scalar_prefetch=0,
            grid=(nb, nj),
            in_specs=[
                pl.BlockSpec((tile_b, C), lambda i, j: (i, 0)),           # idx
                pl.BlockSpec((V_pad, E), lambda i, j: (0, 0), **inv),     # emb
                pl.BlockSpec((CE_pad, H_pad), lambda i, j: (0, 0), **inv),  # w1
                pl.BlockSpec((1, H_pad), lambda i, j: (0, 0), **inv),     # b1
                pl.BlockSpec((H_pad, tile_v), lambda i, j: (0, j)),       # w2
                pl.BlockSpec((1, tile_v), lambda i, j: (0, j)),           # b2
            ],
            out_specs=pl.BlockSpec((tile_b, V_pad), lambda i, j: (i, 0)),
            scratch_shapes=[
                pltpu.VMEM((tile_b, CE_pad), md),                # x (context)
                pltpu.VMEM((tile_b, H_pad), md),                 # h (post-ReLU)
                pltpu.VMEM((tile_b, 1), jnp.float32),            # running max
                pltpu.VMEM((tile_b, 1), jnp.float32),            # running sum
                pltpu.VMEM((nj, tile_b, tile_v), jnp.float32),   # staged logits
            ],
        )
        return pl.pallas_call(
            ngram_kernel,
            out_shape=jax.ShapeDtypeStruct((B_pad, V_pad), od),
            grid_spec=grid_spec,
            compiler_params=pltpu.CompilerParams(
                dimension_semantics=("parallel", "arbitrary"),
                vmem_limit_bytes=vmem_limit),
            cost_estimate=cost,
        )

    args = (idx_p, emb_p, w1_p, b1_p, w2_p, b2_p)
    try:
        out = build(single_buffer_invariants=True)(*args)
    except Exception:
        # Fallback: installed Pallas may reject pl.Buffered(1) single-buffering.
        out = build(single_buffer_invariants=False)(*args)

    # TODO(synk): for very large vocabularies, drop the staged-logits scratch by
    # streaming (tile_b, tile_v) output blocks and folding the final `- lse`
    # into a follow-up pass (or aligned dynamic lane stores once supported).
    # TODO(synk): for large vocab/embedding tables keep the table in HBM
    # (memory_space=pl.ANY) and DMA-gather rows instead of the VMEM-resident
    # one-hot matmul used here.
    return out[:B, :V]


def _reference_forward(inputs, emb_table, w1, b1, w2, b2, *, batch_size):
    embeds = emb_table[inputs].reshape((batch_size, -1))
    h = jnp.maximum(embeds @ w1 + b1, 0.0)
    logits = h @ w2 + b2
    return jax.nn.log_softmax(logits, axis=1)


if __name__ == "__main__":
    key = jax.random.PRNGKey(0)

    def make_params(k, V, E, C, H):
        k_emb, k_w1, k_b1, k_w2, k_b2 = jax.random.split(k, 5)
        emb = jax.random.normal(k_emb, (V, E), jnp.float32)
        # PyTorch Linear stores (out, in); we keep the transposed (in, out).
        w1 = jax.random.normal(k_w1, (C * E, H), jnp.float32) * 0.1
        b1 = jax.random.normal(k_b1, (H,), jnp.float32) * 0.1
        w2 = jax.random.normal(k_w2, (H, V), jnp.float32) * 0.1
        b2 = jax.random.normal(k_b2, (V,), jnp.float32) * 0.1
        return emb, w1, b1, w2, b2

    # --- Test 1: module-consistent toy shapes, f32 parity with the reference.
    V, E, C, B, H = 32, 16, 4, 8, 32
    k_p, k_in, key = jax.random.split(key, 3)
    params = make_params(k_p, V, E, C, H)
    inputs = jax.random.randint(k_in, (B, C), 0, V, dtype=jnp.int32)
    out = jax.block_until_ready(ngram_forward(inputs, *params, batch_size=B))
    ref = _reference_forward(inputs, *params, batch_size=B)
    assert out.shape == (B, V)
    assert jnp.allclose(out, ref, atol=1e-4, rtol=1e-4), (
        float(jnp.max(jnp.abs(out - ref))))

    # --- Test 2: exercises batch padding, multiple batch tiles, multiple
    # streamed vocab tiles (online logsumexp path), still f32.
    V, E, C, B, H = 600, 16, 3, 272, 48
    k_p, k_in, key = jax.random.split(key, 3)
    params = make_params(k_p, V, E, C, H)
    inputs = jax.random.randint(k_in, (B, C), 0, V, dtype=jnp.int32)
    out = jax.block_until_ready(ngram_forward(inputs, *params, batch_size=B))
    ref = _reference_forward(inputs, *params, batch_size=B)
    assert out.shape == (B, V)
    assert jnp.allclose(out, ref, atol=1e-3, rtol=1e-3), (
        float(jnp.max(jnp.abs(out - ref))))

    # --- Test 3: bf16 MXU fast path (bf16 weights/activations/output, f32
    # accumulate + softmax) against the f32 reference, loose tolerance.
    out_bf16 = jax.block_until_ready(
        ngram_forward(inputs, *params, batch_size=B,
                      matmul_dtype=jnp.bfloat16, out_dtype=jnp.bfloat16))
    assert out_bf16.shape == (B, V) and out_bf16.dtype == jnp.bfloat16
    assert jnp.allclose(out_bf16.astype(jnp.float32), ref, atol=3e-1, rtol=0.0), (
        float(jnp.max(jnp.abs(out_bf16.astype(jnp.float32) - ref))))

    print("KERNEL_OK")
</pallas_src>

<mosaic_0001>
module attributes {stable_mosaic.version = 11 : i64} {
  func.func @ngram_kernel(%arg0: i32, %arg1: i32, %arg2: memref<8x4xi32, #tpu.memory_space<vmem>>, %arg3: memref<128x16xf32, #tpu.memory_space<vmem>>, %arg4: memref<128x128xf32, #tpu.memory_space<vmem>>, %arg5: memref<1x128xf32, #tpu.memory_space<vmem>>, %arg6: memref<128x128xf32, #tpu.memory_space<vmem>>, %arg7: memref<1x128xf32, #tpu.memory_space<vmem>>, %arg8: memref<8x128xf32, #tpu.memory_space<vmem>>, %arg9: memref<8x128xf32, #tpu.memory_space<vmem>>, %arg10: memref<8x128xf32, #tpu.memory_space<vmem>>, %arg11: memref<8x1xf32, #tpu.memory_space<vmem>>, %arg12: memref<8x1xf32, #tpu.memory_space<vmem>>, %arg13: memref<1x8x128xf32, #tpu.memory_space<vmem>>) attributes {dimension_semantics = [#tpu.dimension_semantics<parallel>, #tpu.dimension_semantics<arbitrary>], iteration_bounds = array<i64: 1, 1>, scalar_prefetch = 0 : i64, scratch_operands = 5 : i64, tpu.core_type = #tpu.core_type<tc>, window_params = [{transform_indices = @transform_0, window_bounds = array<i64: 8, 4>}, {pipeline_mode = #tpu.pipeline_mode<synchronous>, transform_indices = @transform_1, window_bounds = array<i64: 128, 16>}, {pipeline_mode = #tpu.pipeline_mode<synchronous>, transform_indices = @transform_2, window_bounds = array<i64: 128, 128>}, {pipeline_mode = #tpu.pipeline_mode<synchronous>, transform_indices = @transform_3, window_bounds = array<i64: 1, 128>}, {transform_indices = @transform_4, window_bounds = array<i64: 128, 128>}, {transform_indices = @transform_5, window_bounds = array<i64: 1, 128>}, {transform_indices = @transform_6, window_bounds = array<i64: 8, 128>}]} {
    %c0_i32 = arith.constant 0 : i32
    %0 = arith.cmpi eq, %arg1, %c0_i32 : i32
    %1 = arith.extui %0 : i1 to i32
    %c0_i32_0 = arith.constant 0 : i32
    %2 = arith.cmpi ne, %1, %c0_i32_0 : i32
    scf.if %2 {
      %cst_22 = arith.constant 0.000000e+00 : f32
      %33 = vector.broadcast %cst_22 : f32 to vector<8x128xf32>
      %c0_23 = arith.constant 0 : index
      %c0_24 = arith.constant 0 : index
      %34 = vector.load %arg9[%c0_23, %c0_24] : memref<8x128xf32, #tpu.memory_space<vmem>>, vector<8x128xf32>
      tpu.vector_store %arg9[%c0_23, %c0_24], %33 {strides = array<i32>} : memref<8x128xf32, #tpu.memory_space<vmem>>, vector<8x128xf32>,
      %c0_25 = arith.constant 0 : index
      %c0_26 = arith.constant 0 : index
      %35 = vector.load %arg3[%c0_25, %c0_26] : memref<128x16xf32, #tpu.memory_space<vmem>>, vector<128x16xf32>
      %c0_27 = arith.constant 0 : index
      %c0_28 = arith.constant 0 : index
      %36 = vector.load %arg2[%c0_27, %c0_28] : memref<8x4xi32, #tpu.memory_space<vmem>>, vector<8x4xi32>
      %37 = tpu.iota {dimensions = array<i32: 1>} : vector<8x128xi32>
      %38 = vector.extract_strided_slice %36 {offsets = [0, 0], sizes = [8, 1], strides = [1, 1]} : vector<8x4xi32> to vector<8x1xi32>
      %39 = vector.broadcast %38 : vector<8x1xi32> to vector<8x128xi32>
      %40 = arith.cmpi eq, %39, %37 : vector<8x128xi32>
      %41 = arith.extui %40 : vector<8x128xi1> to vector<8x128xi32>
      %42 = arith.sitofp %41 : vector<8x128xi32> to vector<8x128xf32>
      %cst_29 = arith.constant dense<0.000000e+00> : vector<8x16xf32>
      %43 = tpu.matmul %42, %35, %cst_29 {dimension_numbers = #tpu.dot_dimension_numbers<[1], [0], [0], [1], [0, 0, 1, 1], [], []>} : vector<8x128xf32>, vector<128x16xf32>, vector<8x16xf32> -> vector<8x16xf32>
      %c0_30 = arith.constant 0 : index
      %c0_31 = arith.constant 0 : index
      %44 = vector.load %arg9[%c0_30, %c0_31] : memref<8x128xf32, #tpu.memory_space<vmem>>, vector<8x16xf32>
      tpu.vector_store %arg9[%c0_30, %c0_31], %43 {strides = array<i32>} : memref<8x128xf32, #tpu.memory_space<vmem>>, vector<8x16xf32>,
      %45 = vector.extract_strided_slice %36 {offsets = [0, 1], sizes = [8, 1], strides = [1, 1]} : vector<8x4xi32> to vector<8x1xi32>
      %46 = vector.broadcast %45 : vector<8x1xi32> to vector<8x128xi32>
      %47 = arith.cmpi eq, %46, %37 : vector<8x128xi32>
      %48 = arith.extui %47 : vector<8x128xi1> to vector<8x128xi32>
      %49 = arith.sitofp %48 : vector<8x128xi32> to vector<8x128xf32>
      %cst_32 = arith.constant dense<0.000000e+00> : vector<8x16xf32>
      %50 = tpu.matmul %49, %35, %cst_32 {dimension_numbers = #tpu.dot_dimension_numbers<[1], [0], [0], [1], [0, 0, 1, 1], [], []>} : vector<8x128xf32>, vector<128x16xf32>, vector<8x16xf32> -> vector<8x16xf32>
      %c0_33 = arith.constant 0 : index
      %c16 = arith.constant 16 : index
      %51 = vector.load %arg9[%c0_33, %c16] : memref<8x128xf32, #tpu.memory_space<vmem>>, vector<8x16xf32>
      tpu.vector_store %arg9[%c0_33, %c16], %50 {strides = array<i32>} : memref<8x128xf32, #tpu.memory_space<vmem>>, vector<8x16xf32>,
      %52 = vector.extract_strided_slice %36 {offsets = [0, 2], sizes = [8, 1], strides = [1, 1]} : vector<8x4xi32> to vector<8x1xi32>
      %53 = vector.broadcast %52 : vector<8x1xi32> to vector<8x128xi32>
      %54 = arith.cmpi eq, %53, %37 : vector<8x128xi32>
      %55 = arith.extui %54 : vector<8x128xi1> to vector<8x128xi32>
      %56 = arith.sitofp %55 : vector<8x128xi32> to vector<8x128xf32>
      %cst_34 = arith.constant dense<0.000000e+00> : vector<8x16xf32>
      %57 = tpu.matmul %56, %35, %cst_34 {dimension_numbers = #tpu.dot_dimension_numbers<[1], [0], [0], [1], [0, 0, 1, 1], [], []>} : vector<8x128xf32>, vector<128x16xf32>, vector<8x16xf32> -> vector<8x16xf32>
      %c0_35 = arith.constant 0 : index
      %c32 = arith.constant 32 : index
      %58 = vector.load %arg9[%c0_35, %c32] : memref<8x128xf32, #tpu.memory_space<vmem>>, vector<8x16xf32>
      tpu.vector_store %arg9[%c0_35, %c32], %57 {strides = array<i32>} : memref<8x128xf32, #tpu.memory_space<vmem>>, vector<8x16xf32>,
      %59 = vector.extract_strided_slice %36 {offsets = [0, 3], sizes = [8, 1], strides = [1, 1]} : vector<8x4xi32> to vector<8x1xi32>
      %60 = vector.broadcast %59 : vector<8x1xi32> to vector<8x128xi32>
      %61 = arith.cmpi eq, %60, %37 : vector<8x128xi32>
      %62 = arith.extui %61 : vector<8x128xi1> to vector<8x128xi32>
      %63 = arith.sitofp %62 : vector<8x128xi32> to vector<8x128xf32>
      %cst_36 = arith.constant dense<0.000000e+00> : vector<8x16xf32>
      %64 = tpu.matmul %63, %35, %cst_36 {dimension_numbers = #tpu.dot_dimension_numbers<[1], [0], [0], [1], [0, 0, 1, 1], [], []>} : vector<8x128xf32>, vector<128x16xf32>, vector<8x16xf32> -> vector<8x16xf32>
      %c0_37 = arith.constant 0 : index
      %c48 = arith.constant 48 : index
      %65 = vector.load %arg9[%c0_37, %c48] : memref<8x128xf32, #tpu.memory_space<vmem>>, vector<8x16xf32>
      tpu.vector_store %arg9[%c0_37, %c48], %64 {strides = array<i32>} : memref<8x128xf32, #tpu.memory_space<vmem>>, vector<8x16xf32>,
      %c0_38 = arith.constant 0 : index
      %c0_39 = arith.constant 0 : index
      %66 = vector.load %arg9[%c0_38, %c0_39] : memref<8x128xf32, #tpu.memory_space<vmem>>, vector<8x128xf32>
      %c0_40 = arith.constant 0 : index
      %c0_41 = arith.constant 0 : index
      %67 = vector.load %arg4[%c0_40, %c0_41] : memref<128x128xf32, #tpu.memory_space<vmem>>, vector<128x128xf32>
      %cst_42 = arith.constant dense<0.000000e+00> : vector<8x128xf32>
      %68 = tpu.matmul %66, %67, %cst_42 {dimension_numbers = #tpu.dot_dimension_numbers<[1], [0], [0], [1], [0, 0, 1, 1], [], []>} : vector<8x128xf32>, vector<128x128xf32>, vector<8x128xf32> -> vector<8x128xf32>
      %c0_43 = arith.constant 0 : index
      %c0_44 = arith.constant 0 : index
      %69 = vector.load %arg5[%c0_43, %c0_44] : memref<1x128xf32, #tpu.memory_space<vmem>>, vector<1x128xf32>
      %70 = vector.broadcast %69 : vector<1x128xf32> to vector<8x128xf32>
      %71 = arith.addf %68, %70 : vector<8x128xf32>
      %cst_45 = arith.constant 0.000000e+00 : f32
      %72 = vector.broadcast %cst_45 : f32 to vector<8x128xf32>
      %73 = arith.maximumf %71, %72 : vector<8x128xf32>
      %c0_46 = arith.constant 0 : index
      %c0_47 = arith.constant 0 : index
      %74 = vector.load %arg10[%c0_46, %c0_47] : memref<8x128xf32, #tpu.memory_space<vmem>>, vector<8x128xf32>
      tpu.vector_store %arg10[%c0_46, %c0_47], %73 {strides = array<i32>} : memref<8x128xf32, #tpu.memory_space<vmem>>, vector<8x128xf32>,
      %cst_48 = arith.constant 0xFF800000 : f32
      %75 = vector.broadcast %cst_48 : f32 to vector<8x1xf32>
      %c0_49 = arith.constant 0 : index
      %c0_50 = arith.constant 0 : index
      %76 = vector.load %arg11[%c0_49, %c0_50] : memref<8x1xf32, #tpu.memory_space<vmem>>, vector<8x1xf32>
      tpu.vector_store %arg11[%c0_49, %c0_50], %75 {strides = array<i32>} : memref<8x1xf32, #tpu.memory_space<vmem>>, vector<8x1xf32>,
      %cst_51 = arith.constant 0.000000e+00 : f32
      %77 = vector.broadcast %cst_51 : f32 to vector<8x1xf32>
      %c0_52 = arith.constant 0 : index
      %c0_53 = arith.constant 0 : index
      %78 = vector.load %arg12[%c0_52, %c0_53] : memref<8x1xf32, #tpu.memory_space<vmem>>, vector<8x1xf32>
      tpu.vector_store %arg12[%c0_52, %c0_53], %77 {strides = array<i32>} : memref<8x1xf32, #tpu.memory_space<vmem>>, vector<8x1xf32>,
    } else {
    }
    %c0 = arith.constant 0 : index
    %c0_1 = arith.constant 0 : index
    %3 = vector.load %arg10[%c0, %c0_1] : memref<8x128xf32, #tpu.memory_space<vmem>>, vector<8x128xf32>
    %c0_2 = arith.constant 0 : index
    %c0_3 = arith.constant 0 : index
    %4 = vector.load %arg6[%c0_2, %c0_3] : memref<128x128xf32, #tpu.memory_space<vmem>>, vector<128x128xf32>
    %cst = arith.constant dense<0.000000e+00> : vector<8x128xf32>
    %5 = tpu.matmul %3, %4, %cst {dimension_numbers = #tpu.dot_dimension_numbers<[1], [0], [0], [1], [0, 0, 1, 1], [], []>} : vector<8x128xf32>, vector<128x128xf32>, vector<8x128xf32> -> vector<8x128xf32>
    %c0_4 = arith.constant 0 : index
    %c0_5 = arith.constant 0 : index
    %6 = vector.load %arg7[%c0_4, %c0_5] : memref<1x128xf32, #tpu.memory_space<vmem>>, vector<1x128xf32>
    %7 = vector.broadcast %6 : vector<1x128xf32> to vector<8x128xf32>
    %8 = arith.addf %5, %7 : vector<8x128xf32>
    %c0_6 = arith.constant 0 : index
    %c0_7 = arith.constant 0 : index
    %9 = vector.load %arg11[%c0_6, %c0_7] : memref<8x1xf32, #tpu.memory_space<vmem>>, vector<8x1xf32>
    %cst_8 = arith.constant dense<0xFF800000> : vector<8xf32>
    %10 = vector.multi_reduction <maximumf>, %8, %cst_8 [1] : vector<8x128xf32> to vector<8xf32>
    %11 = vector.shape_cast %10 : vector<8xf32> to vector<8x1xf32>
    %12 = arith.maximumf %9, %11 : vector<8x1xf32>
    %c0_9 = arith.constant 0 : index
    %c0_10 = arith.constant 0 : index
    %13 = vector.load %arg12[%c0_9, %c0_10] : memref<8x1xf32, #tpu.memory_space<vmem>>, vector<8x1xf32>
    %c0_11 = arith.constant 0 : index
    %c0_12 = arith.constant 0 : index
    %14 = vector.load %arg11[%c0_11, %c0_12] : memref<8x1xf32, #tpu.memory_space<vmem>>, vector<8x1xf32>
    %15 = arith.subf %14, %12 : vector<8x1xf32>
    %16 = math.exp %15 : vector<8x1xf32>
    %17 = arith.mulf %13, %16 : vector<8x1xf32>
    %18 = vector.broadcast %12 : vector<8x1xf32> to vector<8x128xf32>
    %19 = arith.subf %8, %18 : vector<8x128xf32>
    %20 = math.exp %19 : vector<8x128xf32>
    %cst_13 = arith.constant dense<0.000000e+00> : vector<8xf32>
    %21 = vector.multi_reduction <add>, %20, %cst_13 [1] : vector<8x128xf32> to vector<8xf32>
    %22 = vector.shape_cast %21 : vector<8xf32> to vector<8x1xf32>
    %23 = arith.addf %17, %22 : vector<8x1xf32>
    %c0_14 = arith.constant 0 : index
    %c0_15 = arith.constant 0 : index
    %24 = vector.load %arg12[%c0_14, %c0_15] : memref<8x1xf32, #tpu.memory_space<vmem>>, vector<8x1xf32>
    tpu.vector_store %arg12[%c0_14, %c0_15], %23 {strides = array<i32>} : memref<8x1xf32, #tpu.memory_space<vmem>>, vector<8x1xf32>,
    %c0_16 = arith.constant 0 : index
    %c0_17 = arith.constant 0 : index
    %25 = vector.load %arg11[%c0_16, %c0_17] : memref<8x1xf32, #tpu.memory_space<vmem>>, vector<8x1xf32>
    tpu.vector_store %arg11[%c0_16, %c0_17], %12 {strides = array<i32>} : memref<8x1xf32, #tpu.memory_space<vmem>>, vector<8x1xf32>,
    %26 = arith.index_cast %arg1 : i32 to index
    %c0_18 = arith.constant 0 : index
    %c0_19 = arith.constant 0 : index
    %27 = vector.load %arg13[%26, %c0_18, %c0_19] : memref<1x8x128xf32, #tpu.memory_space<vmem>>, vector<1x8x128xf32>
    %28 = vector.shape_cast %27 : vector<1x8x128xf32> to vector<8x128xf32>
    %29 = vector.shape_cast %8 : vector<8x128xf32> to vector<1x8x128xf32>
    tpu.vector_store %arg13[%26, %c0_18, %c0_19], %29 {strides = array<i32>} : memref<1x8x128xf32, #tpu.memory_space<vmem>>, vector<1x8x128xf32>,
    %c0_i32_20 = arith.constant 0 : i32
    %30 = arith.cmpi eq, %arg1, %c0_i32_20 : i32
    %31 = arith.extui %30 : i1 to i32
    %c0_i32_21 = arith.constant 0 : i32
    %32 = arith.cmpi ne, %31, %c0_i32_21 : i32
    scf.if %32 {
      %c0_22 = arith.constant 0 : index
      %c0_23 = arith.constant 0 : index
      %33 = vector.load %arg11[%c0_22, %c0_23] : memref<8x1xf32, #tpu.memory_space<vmem>>, vector<8x1xf32>
      %c0_24 = arith.constant 0 : index
      %c0_25 = arith.constant 0 : index
      %34 = vector.load %arg12[%c0_24, %c0_25] : memref<8x1xf32, #tpu.memory_space<vmem>>, vector<8x1xf32>
      %35 = math.log %34 : vector<8x1xf32>
      %36 = arith.addf %33, %35 : vector<8x1xf32>
      %c0_26 = arith.constant 0 : index
      %c0_27 = arith.constant 0 : index
      %c0_28 = arith.constant 0 : index
      %37 = vector.load %arg13[%c0_26, %c0_27, %c0_28] : memref<1x8x128xf32, #tpu.memory_space<vmem>>, vector<1x8x128xf32>
      %38 = vector.shape_cast %37 : vector<1x8x128xf32> to vector<8x128xf32>
      %39 = vector.broadcast %36 : vector<8x1xf32> to vector<8x128xf32>
      %40 = arith.subf %38, %39 : vector<8x128xf32>
      %c0_29 = arith.constant 0 : index
      %c0_30 = arith.constant 0 : index
      %41 = vector.load %arg8[%c0_29, %c0_30] : memref<8x128xf32, #tpu.memory_space<vmem>>, vector<8x128xf32>
      tpu.vector_store %arg8[%c0_29, %c0_30], %40 {strides = array<i32>} : memref<8x128xf32, #tpu.memory_space<vmem>>, vector<8x128xf32>,
    } else {
    }
    return
  }
  func.func @transform_0(%arg0: i32, %arg1: i32) -> (i32, i32) {
    %c0_i32 = arith.constant 0 : i32
    %c0_i32_0 = arith.constant 0 : i32
    return %arg0, %c0_i32 : i32, i32
  }
  func.func @transform_1(%arg0: i32, %arg1: i32) -> (i32, i32) {
    %c0_i32 = arith.constant 0 : i32
    %c0_i32_0 = arith.constant 0 : i32
    %c0_i32_1 = arith.constant 0 : i32
    return %c0_i32, %c0_i32_0 : i32, i32
  }
  func.func @transform_2(%arg0: i32, %arg1: i32) -> (i32, i32) {
    %c0_i32 = arith.constant 0 : i32
    %c0_i32_0 = arith.constant 0 : i32
    %c0_i32_1 = arith.constant 0 : i32
    return %c0_i32, %c0_i32_0 : i32, i32
  }
  func.func @transform_3(%arg0: i32, %arg1: i32) -> (i32, i32) {
    %c0_i32 = arith.constant 0 : i32
    %c0_i32_0 = arith.constant 0 : i32
    %c0_i32_1 = arith.constant 0 : i32
    return %c0_i32, %c0_i32_0 : i32, i32
  }
  func.func @transform_4(%arg0: i32, %arg1: i32) -> (i32, i32) {
    %c0_i32 = arith.constant 0 : i32
    %c0_i32_0 = arith.constant 0 : i32
    return %c0_i32, %arg1 : i32, i32
  }
  func.func @transform_5(%arg0: i32, %arg1: i32) -> (i32, i32) {
    %c0_i32 = arith.constant 0 : i32
    %c0_i32_0 = arith.constant 0 : i32
    return %c0_i32, %arg1 : i32, i32
  }
  func.func @transform_6(%arg0: i32, %arg1: i32) -> (i32, i32) {
    %c0_i32 = arith.constant 0 : i32
    %c0_i32_0 = arith.constant 0 : i32
    return %arg0, %c0_i32 : i32, i32
  }
}

module attributes {stable_mosaic.version = 11 : i64} {
  func.func @ngram_kernel(%arg0: i32, %arg1: i32, %arg2: memref<8x4xi32, #tpu.memory_space<vmem>>, %arg3: memref<128x16xf32, #tpu.memory_space<vmem>>, %arg4: memref<128x128xf32, #tpu.memory_space<vmem>>, %arg5: memref<1x128xf32, #tpu.memory_space<vmem>>, %arg6: memref<128x128xf32, #tpu.memory_space<vmem>>, %arg7: memref<1x128xf32, #tpu.memory_space<vmem>>, %arg8: memref<8x128xf32, #tpu.memory_space<vmem>>, %arg9: memref<8x128xf32, #tpu.memory_space<vmem>>, %arg10: memref<8x128xf32, #tpu.memory_space<vmem>>, %arg11: memref<8x1xf32, #tpu.memory_space<vmem>>, %arg12: memref<8x1xf32, #tpu.memory_space<vmem>>, %arg13: memref<1x8x128xf32, #tpu.memory_space<vmem>>) attributes {dimension_semantics = [#tpu.dimension_semantics<parallel>, #tpu.dimension_semantics<arbitrary>], iteration_bounds = array<i64: 1, 1>, scalar_prefetch = 0 : i64, scratch_operands = 5 : i64, tpu.core_type = #tpu.core_type<tc>, window_params = [{transform_indices = @transform_0, window_bounds = array<i64: 8, 4>}, {pipeline_mode = #tpu.pipeline_mode<synchronous>, transform_indices = @transform_1, window_bounds = array<i64: 128, 16>}, {pipeline_mode = #tpu.pipeline_mode<synchronous>, transform_indices = @transform_2, window_bounds = array<i64: 128, 128>}, {pipeline_mode = #tpu.pipeline_mode<synchronous>, transform_indices = @transform_3, window_bounds = array<i64: 1, 128>}, {transform_indices = @transform_4, window_bounds = array<i64: 128, 128>}, {transform_indices = @transform_5, window_bounds = array<i64: 1, 128>}, {transform_indices = @transform_6, window_bounds = array<i64: 8, 128>}]} {
    %c0_i32 = arith.constant 0 : i32
    %0 = arith.cmpi eq, %arg1, %c0_i32 : i32
    %1 = arith.extui %0 : i1 to i32
    %c0_i32_0 = arith.constant 0 : i32
    %2 = arith.cmpi ne, %1, %c0_i32_0 : i32
    scf.if %2 {
      %cst_22 = arith.constant 0.000000e+00 : f32
      %33 = vector.broadcast %cst_22 : f32 to vector<8x128xf32>
      %c0_23 = arith.constant 0 : index
      %c0_24 = arith.constant 0 : index
      %34 = vector.load %arg9[%c0_23, %c0_24] : memref<8x128xf32, #tpu.memory_space<vmem>>, vector<8x128xf32>
      tpu.vector_store %arg9[%c0_23, %c0_24], %33 {strides = array<i32>} : memref<8x128xf32, #tpu.memory_space<vmem>>, vector<8x128xf32>,
      %c0_25 = arith.constant 0 : index
      %c0_26 = arith.constant 0 : index
      %35 = vector.load %arg3[%c0_25, %c0_26] : memref<128x16xf32, #tpu.memory_space<vmem>>, vector<128x16xf32>
      %c0_27 = arith.constant 0 : index
      %c0_28 = arith.constant 0 : index
      %36 = vector.load %arg2[%c0_27, %c0_28] : memref<8x4xi32, #tpu.memory_space<vmem>>, vector<8x4xi32>
      %37 = tpu.iota {dimensions = array<i32: 1>} : vector<8x128xi32>
      %38 = vector.extract_strided_slice %36 {offsets = [0, 0], sizes = [8, 1], strides = [1, 1]} : vector<8x4xi32> to vector<8x1xi32>
      %39 = vector.broadcast %38 : vector<8x1xi32> to vector<8x128xi32>
      %40 = arith.cmpi eq, %39, %37 : vector<8x128xi32>
      %41 = arith.extui %40 : vector<8x128xi1> to vector<8x128xi32>
      %42 = arith.sitofp %41 : vector<8x128xi32> to vector<8x128xf32>
      %cst_29 = arith.constant dense<0.000000e+00> : vector<8x16xf32>
      %43 = tpu.matmul %42, %35, %cst_29 {dimension_numbers = #tpu.dot_dimension_numbers<[1], [0], [0], [1], [0, 0, 1, 1], [], []>} : vector<8x128xf32>, vector<128x16xf32>, vector<8x16xf32> -> vector<8x16xf32>
      %c0_30 = arith.constant 0 : index
      %c0_31 = arith.constant 0 : index
      %44 = vector.load %arg9[%c0_30, %c0_31] : memref<8x128xf32, #tpu.memory_space<vmem>>, vector<8x16xf32>
      tpu.vector_store %arg9[%c0_30, %c0_31], %43 {strides = array<i32>} : memref<8x128xf32, #tpu.memory_space<vmem>>, vector<8x16xf32>,
      %45 = vector.extract_strided_slice %36 {offsets = [0, 1], sizes = [8, 1], strides = [1, 1]} : vector<8x4xi32> to vector<8x1xi32>
      %46 = vector.broadcast %45 : vector<8x1xi32> to vector<8x128xi32>
      %47 = arith.cmpi eq, %46, %37 : vector<8x128xi32>
      %48 = arith.extui %47 : vector<8x128xi1> to vector<8x128xi32>
      %49 = arith.sitofp %48 : vector<8x128xi32> to vector<8x128xf32>
      %cst_32 = arith.constant dense<0.000000e+00> : vector<8x16xf32>
      %50 = tpu.matmul %49, %35, %cst_32 {dimension_numbers = #tpu.dot_dimension_numbers<[1], [0], [0], [1], [0, 0, 1, 1], [], []>} : vector<8x128xf32>, vector<128x16xf32>, vector<8x16xf32> -> vector<8x16xf32>
      %c0_33 = arith.constant 0 : index
      %c16 = arith.constant 16 : index
      %51 = vector.load %arg9[%c0_33, %c16] : memref<8x128xf32, #tpu.memory_space<vmem>>, vector<8x16xf32>
      tpu.vector_store %arg9[%c0_33, %c16], %50 {strides = array<i32>} : memref<8x128xf32, #tpu.memory_space<vmem>>, vector<8x16xf32>,
      %52 = vector.extract_strided_slice %36 {offsets = [0, 2], sizes = [8, 1], strides = [1, 1]} : vector<8x4xi32> to vector<8x1xi32>
      %53 = vector.broadcast %52 : vector<8x1xi32> to vector<8x128xi32>
      %54 = arith.cmpi eq, %53, %37 : vector<8x128xi32>
      %55 = arith.extui %54 : vector<8x128xi1> to vector<8x128xi32>
      %56 = arith.sitofp %55 : vector<8x128xi32> to vector<8x128xf32>
      %cst_34 = arith.constant dense<0.000000e+00> : vector<8x16xf32>
      %57 = tpu.matmul %56, %35, %cst_34 {dimension_numbers = #tpu.dot_dimension_numbers<[1], [0], [0], [1], [0, 0, 1, 1], [], []>} : vector<8x128xf32>, vector<128x16xf32>, vector<8x16xf32> -> vector<8x16xf32>
      %c0_35 = arith.constant 0 : index
      %c32 = arith.constant 32 : index
      %58 = vector.load %arg9[%c0_35, %c32] : memref<8x128xf32, #tpu.memory_space<vmem>>, vector<8x16xf32>
      tpu.vector_store %arg9[%c0_35, %c32], %57 {strides = array<i32>} : memref<8x128xf32, #tpu.memory_space<vmem>>, vector<8x16xf32>,
      %59 = vector.extract_strided_slice %36 {offsets = [0, 3], sizes = [8, 1], strides = [1, 1]} : vector<8x4xi32> to vector<8x1xi32>
      %60 = vector.broadcast %59 : vector<8x1xi32> to vector<8x128xi32>
      %61 = arith.cmpi eq, %60, %37 : vector<8x128xi32>
      %62 = arith.extui %61 : vector<8x128xi1> to vector<8x128xi32>
      %63 = arith.sitofp %62 : vector<8x128xi32> to vector<8x128xf32>
      %cst_36 = arith.constant dense<0.000000e+00> : vector<8x16xf32>
      %64 = tpu.matmul %63, %35, %cst_36 {dimension_numbers = #tpu.dot_dimension_numbers<[1], [0], [0], [1], [0, 0, 1, 1], [], []>} : vector<8x128xf32>, vector<128x16xf32>, vector<8x16xf32> -> vector<8x16xf32>
      %c0_37 = arith.constant 0 : index
      %c48 = arith.constant 48 : index
      %65 = vector.load %arg9[%c0_37, %c48] : memref<8x128xf32, #tpu.memory_space<vmem>>, vector<8x16xf32>
      tpu.vector_store %arg9[%c0_37, %c48], %64 {strides = array<i32>} : memref<8x128xf32, #tpu.memory_space<vmem>>, vector<8x16xf32>,
      %c0_38 = arith.constant 0 : index
      %c0_39 = arith.constant 0 : index
      %66 = vector.load %arg9[%c0_38, %c0_39] : memref<8x128xf32, #tpu.memory_space<vmem>>, vector<8x128xf32>
      %c0_40 = arith.constant 0 : index
      %c0_41 = arith.constant 0 : index
      %67 = vector.load %arg4[%c0_40, %c0_41] : memref<128x128xf32, #tpu.memory_space<vmem>>, vector<128x128xf32>
      %cst_42 = arith.constant dense<0.000000e+00> : vector<8x128xf32>
      %68 = tpu.matmul %66, %67, %cst_42 {dimension_numbers = #tpu.dot_dimension_numbers<[1], [0], [0], [1], [0, 0, 1, 1], [], []>} : vector<8x128xf32>, vector<128x128xf32>, vector<8x128xf32> -> vector<8x128xf32>
      %c0_43 = arith.constant 0 : index
      %c0_44 = arith.constant 0 : index
      %69 = vector.load %arg5[%c0_43, %c0_44] : memref<1x128xf32, #tpu.memory_space<vmem>>, vector<1x128xf32>
      %70 = vector.broadcast %69 : vector<1x128xf32> to vector<8x128xf32>
      %71 = arith.addf %68, %70 : vector<8x128xf32>
      %cst_45 = arith.constant 0.000000e+00 : f32
      %72 = vector.broadcast %cst_45 : f32 to vector<8x128xf32>
      %73 = arith.maximumf %71, %72 : vector<8x128xf32>
      %c0_46 = arith.constant 0 : index
      %c0_47 = arith.constant 0 : index
      %74 = vector.load %arg10[%c0_46, %c0_47] : memref<8x128xf32, #tpu.memory_space<vmem>>, vector<8x128xf32>
      tpu.vector_store %arg10[%c0_46, %c0_47], %73 {strides = array<i32>} : memref<8x128xf32, #tpu.memory_space<vmem>>, vector<8x128xf32>,
      %cst_48 = arith.constant 0xFF800000 : f32
      %75 = vector.broadcast %cst_48 : f32 to vector<8x1xf32>
      %c0_49 = arith.constant 0 : index
      %c0_50 = arith.constant 0 : index
      %76 = vector.load %arg11[%c0_49, %c0_50] : memref<8x1xf32, #tpu.memory_space<vmem>>, vector<8x1xf32>
      tpu.vector_store %arg11[%c0_49, %c0_50], %75 {strides = array<i32>} : memref<8x1xf32, #tpu.memory_space<vmem>>, vector<8x1xf32>,
      %cst_51 = arith.constant 0.000000e+00 : f32
      %77 = vector.broadcast %cst_51 : f32 to vector<8x1xf32>
      %c0_52 = arith.constant 0 : index
      %c0_53 = arith.constant 0 : index
      %78 = vector.load %arg12[%c0_52, %c0_53] : memref<8x1xf32, #tpu.memory_space<vmem>>, vector<8x1xf32>
      tpu.vector_store %arg12[%c0_52, %c0_53], %77 {strides = array<i32>} : memref<8x1xf32, #tpu.memory_space<vmem>>, vector<8x1xf32>,
    } else {
    }
    %c0 = arith.constant 0 : index
    %c0_1 = arith.constant 0 : index
    %3 = vector.load %arg10[%c0, %c0_1] : memref<8x128xf32, #tpu.memory_space<vmem>>, vector<8x128xf32>
    %c0_2 = arith.constant 0 : index
    %c0_3 = arith.constant 0 : index
    %4 = vector.load %arg6[%c0_2, %c0_3] : memref<128x128xf32, #tpu.memory_space<vmem>>, vector<128x128xf32>
    %cst = arith.constant dense<0.000000e+00> : vector<8x128xf32>
    %5 = tpu.matmul %3, %4, %cst {dimension_numbers = #tpu.dot_dimension_numbers<[1], [0], [0], [1], [0, 0, 1, 1], [], []>} : vector<8x128xf32>, vector<128x128xf32>, vector<8x128xf32> -> vector<8x128xf32>
    %c0_4 = arith.constant 0 : index
    %c0_5 = arith.constant 0 : index
    %6 = vector.load %arg7[%c0_4, %c0_5] : memref<1x128xf32, #tpu.memory_space<vmem>>, vector<1x128xf32>
    %7 = vector.broadcast %6 : vector<1x128xf32> to vector<8x128xf32>
    %8 = arith.addf %5, %7 : vector<8x128xf32>
    %c0_6 = arith.constant 0 : index
    %c0_7 = arith.constant 0 : index
    %9 = vector.load %arg11[%c0_6, %c0_7] : memref<8x1xf32, #tpu.memory_space<vmem>>, vector<8x1xf32>
    %cst_8 = arith.constant dense<0xFF800000> : vector<8xf32>
    %10 = vector.multi_reduction <maximumf>, %8, %cst_8 [1] : vector<8x128xf32> to vector<8xf32>
    %11 = vector.shape_cast %10 : vector<8xf32> to vector<8x1xf32>
    %12 = arith.maximumf %9, %11 : vector<8x1xf32>
    %c0_9 = arith.constant 0 : index
    %c0_10 = arith.constant 0 : index
    %13 = vector.load %arg12[%c0_9, %c0_10] : memref<8x1xf32, #tpu.memory_space<vmem>>, vector<8x1xf32>
    %c0_11 = arith.constant 0 : index
    %c0_12 = arith.constant 0 : index
    %14 = vector.load %arg11[%c0_11, %c0_12] : memref<8x1xf32, #tpu.memory_space<vmem>>, vector<8x1xf32>
    %15 = arith.subf %14, %12 : vector<8x1xf32>
    %16 = math.exp %15 : vector<8x1xf32>
    %17 = arith.mulf %13, %16 : vector<8x1xf32>
    %18 = vector.broadcast %12 : vector<8x1xf32> to vector<8x128xf32>
    %19 = arith.subf %8, %18 : vector<8x128xf32>
    %20 = math.exp %19 : vector<8x128xf32>
    %cst_13 = arith.constant dense<0.000000e+00> : vector<8xf32>
    %21 = vector.multi_reduction <add>, %20, %cst_13 [1] : vector<8x128xf32> to vector<8xf32>
    %22 = vector.shape_cast %21 : vector<8xf32> to vector<8x1xf32>
    %23 = arith.addf %17, %22 : vector<8x1xf32>
    %c0_14 = arith.constant 0 : index
    %c0_15 = arith.constant 0 : index
    %24 = vector.load %arg12[%c0_14, %c0_15] : memref<8x1xf32, #tpu.memory_space<vmem>>, vector<8x1xf32>
    tpu.vector_store %arg12[%c0_14, %c0_15], %23 {strides = array<i32>} : memref<8x1xf32, #tpu.memory_space<vmem>>, vector<8x1xf32>,
    %c0_16 = arith.constant 0 : index
    %c0_17 = arith.constant 0 : index
    %25 = vector.load %arg11[%c0_16, %c0_17] : memref<8x1xf32, #tpu.memory_space<vmem>>, vector<8x1xf32>
    tpu.vector_store %arg11[%c0_16, %c0_17], %12 {strides = array<i32>} : memref<8x1xf32, #tpu.memory_space<vmem>>, vector<8x1xf32>,
    %26 = arith.index_cast %arg1 : i32 to index
    %c0_18 = arith.constant 0 : index
    %c0_19 = arith.constant 0 : index
    %27 = vector.load %arg13[%26, %c0_18, %c0_19] : memref<1x8x128xf32, #tpu.memory_space<vmem>>, vector<1x8x128xf32>
    %28 = vector.shape_cast %27 : vector<1x8x128xf32> to vector<8x128xf32>
    %29 = vector.shape_cast %8 : vector<8x128xf32> to vector<1x8x128xf32>
    tpu.vector_store %arg13[%26, %c0_18, %c0_19], %29 {strides = array<i32>} : memref<1x8x128xf32, #tpu.memory_space<vmem>>, vector<1x8x128xf32>,
    %c0_i32_20 = arith.constant 0 : i32
    %30 = arith.cmpi eq, %arg1, %c0_i32_20 : i32
    %31 = arith.extui %30 : i1 to i32
    %c0_i32_21 = arith.constant 0 : i32
    %32 = arith.cmpi ne, %31, %c0_i32_21 : i32
    scf.if %32 {
      %c0_22 = arith.constant 0 : index
      %c0_23 = arith.constant 0 : index
      %33 = vector.load %arg11[%c0_22, %c0_23] : memref<8x1xf32, #tpu.memory_space<vmem>>, vector<8x1xf32>
      %c0_24 = arith.constant 0 : index
      %c0_25 = arith.constant 0 : index
      %34 = vector.load %arg12[%c0_24, %c0_25] : memref<8x1xf32, #tpu.memory_space<vmem>>, vector<8x1xf32>
      %35 = math.log %34 : vector<8x1xf32>
      %36 = arith.addf %33, %35 : vector<8x1xf32>
      %c0_26 = arith.constant 0 : index
      %c0_27 = arith.constant 0 : index
      %c0_28 = arith.constant 0 : index
      %37 = vector.load %arg13[%c0_26, %c0_27, %c0_28] : memref<1x8x128xf32, #tpu.memory_space<vmem>>, vector<1x8x128xf32>
      %38 = vector.shape_cast %37 : vector<1x8x128xf32> to vector<8x128xf32>
      %39 = vector.broadcast %36 : vector<8x1xf32> to vector<8x128xf32>
      %40 = arith.subf %38, %39 : vector<8x128xf32>
      %c0_29 = arith.constant 0 : index
      %c0_30 = arith.constant 0 : index
      %41 = vector.load %arg8[%c0_29, %c0_30] : memref<8x128xf32, #tpu.memory_space<vmem>>, vector<8x128xf32>
      tpu.vector_store %arg8[%c0_29, %c0_30], %40 {strides = array<i32>} : memref<8x128xf32, #tpu.memory_space<vmem>>, vector<8x128xf32>,
    } else {
    }
    return
  }
  func.func @transform_0(%arg0: i32, %arg1: i32) -> (i32, i32) {
    %c0_i32 = arith.constant 0 : i32
    %c0_i32_0 = arith.constant 0 : i32
    return %arg0, %c0_i32 : i32, i32
  }
  func.func @transform_1(%arg0: i32, %arg1: i32) -> (i32, i32) {
    %c0_i32 = arith.constant 0 : i32
    %c0_i32_0 = arith.constant 0 : i32
    %c0_i32_1 = arith.constant 0 : i32
    return %c0_i32, %c0_i32_0 : i32, i32
  }
  func.func @transform_2(%arg0: i32, %arg1: i32) -> (i32, i32) {
    %c0_i32 = arith.constant 0 : i32
    %c0_i32_0 = arith.constant 0 : i32
    %c0_i32_1 = arith.constant 0 : i32
    return %c0_i32, %c0_i32_0 : i32, i32
  }
  func.func @transform_3(%arg0: i32, %arg1: i32) -> (i32, i32) {
    %c0_i32 = arith.constant 0 : i32
    %c0_i32_0 = arith.constant 0 : i32
    %c0_i32_1 = arith.constant 0 : i32
    return %c0_i32, %c0_i32_0 : i32, i32
  }
  func.func @transform_4(%arg0: i32, %arg1: i32) -> (i32, i32) {
    %c0_i32 = arith.constant 0 : i32
    %c0_i32_0 = arith.constant 0 : i32
    return %c0_i32, %arg1 : i32, i32
  }
  func.func @transform_5(%arg0: i32, %arg1: i32) -> (i32, i32) {
    %c0_i32 = arith.constant 0 : i32
    %c0_i32_0 = arith.constant 0 : i32
    return %c0_i32, %arg1 : i32, i32
  }
  func.func @transform_6(%arg0: i32, %arg1: i32) -> (i32, i32) {
    %c0_i32 = arith.constant 0 : i32
    %c0_i32_0 = arith.constant 0 : i32
    return %arg0, %c0_i32 : i32, i32
  }
}

</mosaic_0001>

<llo_original>
// kernel: tpu_custom_call.1
$region0: #{tpu_custom_call.1}
  #allocation0 [shape = 'u32[]', space=smem, size = 0x4, offset = 0x4, fixed_abs, tag = 'smem constant byte address 0x4 - core index']
  #allocation1 [shape = 'u32[72,128]{1,0:T(1,128)}', space=vmem, size = 0x9000, scoped, tag = 'internal scratch']
  #allocation2 [shape = 'f32[8,128]{1,0:T(8,128)}', space=vmem, size = 0x1000, scoped, tag = 'scratch operand']
  #allocation3 [shape = 'f32[8,128]{1,0:T(8,128)}', space=vmem, size = 0x1000, scoped, tag = 'scratch operand']
  #allocation4 [shape = 'f32[8,1]{1,0:T(8,128)}', space=vmem, size = 0x1000, scoped, tag = 'scratch operand']
  #allocation5 [shape = 'f32[8,1]{1,0:T(8,128)}', space=vmem, size = 0x1000, scoped, tag = 'scratch operand']
  #allocation6 [shape = 'f32[1,8,128]{2,1,0:T(8,128)}', space=vmem, size = 0x1000, scoped, tag = 'scratch operand']
  %s0 = inlined_call_operand.vmem [shape: s32[8,4], index: 0, kind: input, shape index: {}]
  %s1 = inlined_call_operand.vmem [shape: f32[128,16], index: 1, kind: input, shape index: {}]
  %s2 = inlined_call_operand.vmem [shape: f32[128,128], index: 2, kind: input, shape index: {}]
  %s3 = inlined_call_operand.vmem [shape: f32[1,128], index: 3, kind: input, shape index: {}]
  %s4 = inlined_call_operand.hbm [shape: f32[128,128], index: 4, kind: input, shape index: {}]
  %s5 = inlined_call_operand.vmem [shape: f32[1,128], index: 5, kind: input, shape index: {}]
  %s6 = inlined_call_operand.hbm [shape: f32[8,128], index: 6, kind: output, shape index: {}]
  %s7 = sld [smem:[#allocation0]]
  $region46: #{tpu_custom_call.1} parent=0
    _
  %s9 = ssub.s32 1, %s7
  %s10 = scalar_select 0, %s9, %s7
  $region1: #{tpu_custom_call.1} parent=0
    #allocation7 [shape = 'u8[65536]{0}', space=vmem, size = 0x10000, scoped, tag = 'input window, operand 4, single buffered']
    #allocation8 [shape = 's32[1]{0}', space=sflag, size = 0x4, scoped, tag = 'scoped memory for tpu_custom_call.1']
    #allocation9 [shape = 's32[1]{0}', space=sflag, size = 0x4, scoped, tag = 'scoped memory for tpu_custom_call.1']
    #allocation10 [shape = 'u8[4096]{0}', space=vmem, size = 0x1000, scoped, tag = 'output window, operand 0, single buffered']
    %11 = vsyncpa [#allocation8], 0
    %12 = vsyncpa [#allocation9], 0
    // Predicated region
    $region2: #{tpu_custom_call.1} parent=1 // pred_check
      _
    $region3: #{tpu_custom_call.1} parent=1 // pred_check_branch
      %14 = sbr.rel (0) target = $region5
    $region4: #{tpu_custom_call.1} parent=1 // pred_region
      _
    $region5: #{tpu_custom_call.1} parent=1 // pred_fallthru
      _
    // Predicated region
    $region6: #{tpu_custom_call.1} parent=1 // pred_check
      _
    $region7: #{tpu_custom_call.1} parent=1 // pred_check_branch
      %16 = sbr.rel (0) target = $region9
    $region8: #{tpu_custom_call.1} parent=1 // pred_region
      _
    $region9: #{tpu_custom_call.1} parent=1 // pred_fallthru
      _
    // Predicated region
    $region10: #{tpu_custom_call.1} parent=1 // pred_check
      _
    $region11: #{tpu_custom_call.1} parent=1 // pred_check_branch
      %18 = sbr.rel (0) target = $region13
    $region12: #{tpu_custom_call.1} parent=1 // pred_region
      _
    $region13: #{tpu_custom_call.1} parent=1 // pred_fallthru
      _
    // Predicated region
    $region14: #{tpu_custom_call.1} parent=1 // pred_check
      _
    $region15: #{tpu_custom_call.1} parent=1 // pred_check_branch
      %20 = sbr.rel (0) target = $region17
    $region16: #{tpu_custom_call.1} parent=1 // pred_region
      _
    $region17: #{tpu_custom_call.1} parent=1 // pred_fallthru
      _
    // Predicated region
    $region18: #{tpu_custom_call.1} parent=1 // pred_check
      _
    $region19: #{tpu_custom_call.1} parent=1 // pred_check_branch
      %22 = sbr.rel (0) target = $region21
    $region20: #{tpu_custom_call.1} parent=1 // pred_region
      %24 = vsyncadd [#allocation8], 0
      %s25 = sshll.u32 %s4, 4
      %s26 = int_to_ptr.hbm [resolvable:$true] %s25
      %s27 = sshll.u32 [#allocation7], 4
      %s28 = int_to_ptr.vmem [resolvable:$true] %s27
      %33 = dma.hbm_to_vmem [thread:$0]  %s26, 2048, %s28, [#allocation8], 128, 128, 8
    $region21: #{tpu_custom_call.1} parent=1 // pred_fallthru
      _
    // Predicated region
    $region22: #{tpu_custom_call.1} parent=1 // pred_check
      _
    $region23: #{tpu_custom_call.1} parent=1 // pred_check_branch
      %35 = sbr.rel (0) target = $region25
    $region24: #{tpu_custom_call.1} parent=1 // pred_region
      _
    $region25: #{tpu_custom_call.1} parent=1 // pred_fallthru
      _
    // Predicated region
    $region26: #{tpu_custom_call.1} parent=1 // pred_check
      _
    $region27: #{tpu_custom_call.1} parent=1 // pred_check_branch
      %37 = sbr.rel (0) target = $region29
    $region28: #{tpu_custom_call.1} parent=1 // pred_region
      %39 = dma.done [#allocation8], 2048
    $region29: #{tpu_custom_call.1} parent=1 // pred_fallthru
      _
    %p40 = scmp.eq.s32.totalorder 0, 0
    // Predicated region
    $region30: #{tpu_custom_call.1} parent=1 // pred_check
      %p41 = pneg %p40
    $region31: #{tpu_custom_call.1} parent=1 // pred_check_branch
      %43 = sbr.rel (%p41) target = $region33
    $region32: #{tpu_custom_call.1} parent=1 // pred_region
      %44 = vst [vmem:[#allocation2] sm:$0xff] 0.0
      %v45 = vld [vmem:[%s1] sm:$0xff]
      %v46 = vld [vmem:[%s1 + $0x8] sm:$0xff]
      %v47 = vld [vmem:[%s1 + $0x10] sm:$0xff]
      %v48 = vld [vmem:[%s1 + $0x18] sm:$0xff]
      %v49 = vld [vmem:[%s1 + $0x20] sm:$0xff]
      %v50 = vld [vmem:[%s1 + $0x28] sm:$0xff]
      %v51 = vld [vmem:[%s1 + $0x30] sm:$0xff]
      %v52 = vld [vmem:[%s1 + $0x38] sm:$0xff]
      %v53 = vld [vmem:[%s1 + $0x40] sm:$0xff]
      %v54 = vld [vmem:[%s1 + $0x48] sm:$0xff]
      %v55 = vld [vmem:[%s1 + $0x50] sm:$0xff]
      %v56 = vld [vmem:[%s1 + $0x58] sm:$0xff]
      %v57 = vld [vmem:[%s1 + $0x60] sm:$0xff]
      %v58 = vld [vmem:[%s1 + $0x68] sm:$0xff]
      %v59 = vld [vmem:[%s1 + $0x70] sm:$0xff]
      %v60 = vld [vmem:[%s1 + $0x78] sm:$0xff]
      %v61 = vld [vmem:[%s0] sm:$0xff]
      %v62 = vlaneseq
      %v63 = vand.u32 %v62, 127
      %64 = vset.pattern.permute.xlu0 0
      %65 = vperm.xlu0 %64, %v61
      %v66 = vpop.permute.xlu0 %65
      %vm67 = vcmp.eq.s32.totalorder %v66, %v63
      %v68 = vsel %vm67, 1, 0
      %v69 = vcvt.s32.f32 %v68
      %70 = vmatpush.msra.mxu0 %v60
      %71 = vmatpush.msra.mxu0 %v59
      %72 = vmatpush.msra.mxu0 %v58
      %73 = vmatpush.msra.mxu0 %v57
      %74 = vmatpush.msra.mxu0 %v56
      %75 = vmatpush.msra.mxu0 %v55
      %76 = vmatpush.msra.mxu0 %v54
      %77 = vmatpush.msra.mxu0 %v53
      %78 = vmatpush.msra.mxu0 %v52
      %79 = vmatpush.msra.mxu0 %v51
      %80 = vmatpush.msra.mxu0 %v50
      %81 = vmatpush.msra.mxu0 %v49
      %82 = vmatpush.msra.mxu0 %v48
      %83 = vmatpush.msra.mxu0 %v47
      %84 = vmatpush.msra.mxu0 %v46
      %85 = vmatpush.msra.mxu0 %v45
      %86 = vmatmul.f32.gmra.mxu0 %v69
      %v87 = vpop.f32.mrf.mxu0
      %v88 = vadd.f32 0.0, %v87
      %89 = vdwg.mxu0
      %vm90 = vcmask 130048
      %91 = vst.msk [vmem:[#allocation2] sm:$0xff] %vm90, %v88
      %92 = vset.pattern.permute.xlu0 1
      %93 = vperm.xlu0 %92, %v61
      %v94 = vpop.permute.xlu0 %93
      %vm95 = vcmp.eq.s32.totalorder %v94, %v63
      %v96 = vsel %vm95, 1, 0
      %v97 = vcvt.s32.f32 %v96
      %98 = vmatpush.msra.mxu0 %v60
      %99 = vmatpush.msra.mxu0 %v59
      %100 = vmatpush.msra.mxu0 %v58
      %101 = vmatpush.msra.mxu0 %v57
      %102 = vmatpush.msra.mxu0 %v56
      %103 = vmatpush.msra.mxu0 %v55
      %104 = vmatpush.msra.mxu0 %v54
      %105 = vmatpush.msra.mxu0 %v53
      %106 = vmatpush.msra.mxu0 %v52
      %107 = vmatpush.msra.mxu0 %v51
      %108 = vmatpush.msra.mxu0 %v50
      %109 = vmatpush.msra.mxu0 %v49
      %110 = vmatpush.msra.mxu0 %v48
      %111 = vmatpush.msra.mxu0 %v47
      %112 = vmatpush.msra.mxu0 %v46
      %113 = vmatpush.msra.mxu0 %v45
      %114 = vmatmul.f32.gmra.mxu0 %v97
      %v115 = vpop.f32.mrf.mxu0
      %v116 = vadd.f32 0.0, %v115
      %117 = vdwg.mxu0
      %119 = vrot.lane.b32.xlu0 %v116, 16
      %v120 = vpop.permute.xlu0 %119
      %vm122 = vcmask 261248
      %123 = vst.msk [vmem:[#allocation2] sm:$0xff] %vm122, %v120
      %124 = vset.pattern.permute.xlu0 2
      %125 = vperm.xlu0 %124, %v61
      %v126 = vpop.permute.xlu0 %125
      %vm127 = vcmp.eq.s32.totalorder %v126, %v63
      %v128 = vsel %vm127, 1, 0
      %v129 = vcvt.s32.f32 %v128
      %130 = vmatpush.msra.mxu0 %v60
      %131 = vmatpush.msra.mxu0 %v59
      %132 = vmatpush.msra.mxu0 %v58
      %133 = vmatpush.msra.mxu0 %v57
      %134 = vmatpush.msra.mxu0 %v56
      %135 = vmatpush.msra.mxu0 %v55
      %136 = vmatpush.msra.mxu0 %v54
      %137 = vmatpush.msra.mxu0 %v53
      %138 = vmatpush.msra.mxu0 %v52
      %139 = vmatpush.msra.mxu0 %v51
      %140 = vmatpush.msra.mxu0 %v50
      %141 = vmatpush.msra.mxu0 %v49
      %142 = vmatpush.msra.mxu0 %v48
      %143 = vmatpush.msra.mxu0 %v47
      %144 = vmatpush.msra.mxu0 %v46
      %145 = vmatpush.msra.mxu0 %v45
      %146 = vmatmul.f32.gmra.mxu0 %v129
      %v147 = vpop.f32.mrf.mxu0
      %v148 = vadd.f32 0.0, %v147
      %149 = vdwg.mxu0
      %151 = vrot.lane.b32.xlu0 %v148, 32
      %v152 = vpop.permute.xlu0 %151
      %vm154 = vcmask 392448
      %155 = vst.msk [vmem:[#allocation2] sm:$0xff] %vm154, %v152
      %156 = vset.pattern.permute.xlu0 3
      %157 = vperm.xlu0 %156, %v61
      %v158 = vpop.permute.xlu0 %157
      %vm159 = vcmp.eq.s32.totalorder %v158, %v63
      %v160 = vsel %vm159, 1, 0
      %v161 = vcvt.s32.f32 %v160
      %162 = vmatpush.msra.mxu0 %v60
      %163 = vmatpush.msra.mxu0 %v59
      %164 = vmatpush.msra.mxu0 %v58
      %165 = vmatpush.msra.mxu0 %v57
      %166 = vmatpush.msra.mxu0 %v56
      %167 = vmatpush.msra.mxu0 %v55
      %168 = vmatpush.msra.mxu0 %v54
      %169 = vmatpush.msra.mxu0 %v53
      %170 = vmatpush.msra.mxu0 %v52
      %171 = vmatpush.msra.mxu0 %v51
      %172 = vmatpush.msra.mxu0 %v50
      %173 = vmatpush.msra.mxu0 %v49
      %174 = vmatpush.msra.mxu0 %v48
      %175 = vmatpush.msra.mxu0 %v47
      %176 = vmatpush.msra.mxu0 %v46
      %177 = vmatpush.msra.mxu0 %v45
      %178 = vmatmul.f32.gmra.mxu0 %v161
      %v179 = vpop.f32.mrf.mxu0
      %v180 = vadd.f32 0.0, %v179
      %181 = vdwg.mxu0
      %183 = vrot.lane.b32.xlu0 %v180, 48
      %v184 = vpop.permute.xlu0 %183
      %vm186 = vcmask 523648
      %187 = vst.msk [vmem:[#allocation2] sm:$0xff] %vm186, %v184
      %v188 = vld [vmem:[#allocation2] sm:$0xff]
      %v189 = vld [vmem:[%s2] sm:$0xff]
      %v190 = vld [vmem:[%s2 + $0x8] sm:$0xff]
      %v191 = vld [vmem:[%s2 + $0x10] sm:$0xff]
      %v192 = vld [vmem:[%s2 + $0x18] sm:$0xff]
      %v193 = vld [vmem:[%s2 + $0x20] sm:$0xff]
      %v194 = vld [vmem:[%s2 + $0x28] sm:$0xff]
      %v195 = vld [vmem:[%s2 + $0x30] sm:$0xff]
      %v196 = vld [vmem:[%s2 + $0x38] sm:$0xff]
      %v197 = vld [vmem:[%s2 + $0x40] sm:$0xff]
      %v198 = vld [vmem:[%s2 + $0x48] sm:$0xff]
      %v199 = vld [vmem:[%s2 + $0x50] sm:$0xff]
      %v200 = vld [vmem:[%s2 + $0x58] sm:$0xff]
      %v201 = vld [vmem:[%s2 + $0x60] sm:$0xff]
      %v202 = vld [vmem:[%s2 + $0x68] sm:$0xff]
      %v203 = vld [vmem:[%s2 + $0x70] sm:$0xff]
      %v204 = vld [vmem:[%s2 + $0x78] sm:$0xff]
      %v205 = vld [vmem:[%s3] sm:$0x1]
      %v207 = vperm.slane %v205, 0
      %209 = vmatpush.msra.mxu0 %v204
      %210 = vmatpush.msra.mxu0 %v203
      %211 = vmatpush.msra.mxu0 %v202
      %212 = vmatpush.msra.mxu0 %v201
      %213 = vmatpush.msra.mxu0 %v200
      %214 = vmatpush.msra.mxu0 %v199
      %215 = vmatpush.msra.mxu0 %v198
      %216 = vmatpush.msra.mxu0 %v197
      %217 = vmatpush.msra.mxu0 %v196
      %218 = vmatpush.msra.mxu0 %v195
      %219 = vmatpush.msra.mxu0 %v194
      %220 = vmatpush.msra.mxu0 %v193
      %221 = vmatpush.msra.mxu0 %v192
      %222 = vmatpush.msra.mxu0 %v191
      %223 = vmatpush.msra.mxu0 %v190
      %224 = vmatpush.msra.mxu0 %v189
      %225 = vmatmul.f32.gmra.mxu0 %v188
      %v226 = vpop.f32.mrf.mxu0
      %v227 = vadd.f32 %v207, %v226
      %228 = vdwg.mxu0
      %v229 = vmax.f32 %v227, 0.0
      %230 = vst [vmem:[#allocation3] sm:$0xff] %v229
      %vm231 = vcmask 7168
      %232 = vst.msk [vmem:[#allocation4] sm:$0xff] %vm231, -inf
      %233 = vst.msk [vmem:[#allocation5] sm:$0xff] %vm231, 0.0
    $region33: #{tpu_custom_call.1} parent=1 // pred_fallthru
      _
    %v234 = vld [vmem:[#allocation3] sm:$0xff]
    %v235 = vld [vmem:[#allocation7] sm:$0xff]
    %v236 = vld [vmem:[#allocation7 + $0x8] sm:$0xff]
    %v237 = vld [vmem:[#allocation7 + $0x10] sm:$0xff]
    %v238 = vld [vmem:[#allocation7 + $0x18] sm:$0xff]
    %v239 = vld [vmem:[#allocation7 + $0x20] sm:$0xff]
    %v240 = vld [vmem:[#allocation7 + $0x28] sm:$0xff]
    %v241 = vld [vmem:[#allocation7 + $0x30] sm:$0xff]
    %v242 = vld [vmem:[#allocation7 + $0x38] sm:$0xff]
    %v243 = vld [vmem:[#allocation7 + $0x40] sm:$0xff]
    %v244 = vld [vmem:[#allocation7 + $0x48] sm:$0xff]
    %v245 = vld [vmem:[#allocation7 + $0x50] sm:$0xff]
    %v246 = vld [vmem:[#allocation7 + $0x58] sm:$0xff]
    %v247 = vld [vmem:[#allocation7 + $0x60] sm:$0xff]
    %v248 = vld [vmem:[#allocation7 + $0x68] sm:$0xff]
    %v249 = vld [vmem:[#allocation7 + $0x70] sm:$0xff]
    %v250 = vld [vmem:[#allocation7 + $0x78] sm:$0xff]
    %v251 = vld [vmem:[%s5] sm:$0x1]
    %v253 = vperm.slane %v251, 0
    %255 = vmatpush.msra.mxu0 %v250
    %256 = vmatpush.msra.mxu0 %v249
    %257 = vmatpush.msra.mxu0 %v248
    %258 = vmatpush.msra.mxu0 %v247
    %259 = vmatpush.msra.mxu0 %v246
    %260 = vmatpush.msra.mxu0 %v245
    %261 = vmatpush.msra.mxu0 %v244
    %262 = vmatpush.msra.mxu0 %v243
    %263 = vmatpush.msra.mxu0 %v242
    %264 = vmatpush.msra.mxu0 %v241
    %265 = vmatpush.msra.mxu0 %v240
    %266 = vmatpush.msra.mxu0 %v239
    %267 = vmatpush.msra.mxu0 %v238
    %268 = vmatpush.msra.mxu0 %v237
    %269 = vmatpush.msra.mxu0 %v236
    %270 = vmatpush.msra.mxu0 %v235
    %271 = vmatmul.f32.gmra.mxu0 %v234
    %v272 = vpop.f32.mrf.mxu0
    %v273 = vadd.f32 %v253, %v272
    %274 = vdwg.mxu0
    %v275 = vld [vmem:[#allocation4] sm:$0xff]
    %276 = vmax.xlane.f32.xlu0 %v273
    %v277 = vpop.xlane.xlu0 %276
    %v278 = vmax.f32 %v275, %v277
    %v279 = vld [vmem:[#allocation5] sm:$0xff]
    %v280 = vsub.f32 %v275, %v278
    %v281 = vmul.f32 %v280, 1.442695
    %v282 = vpow.pop %v281
    %v283 = vmul.f32 %v279, %v282
    %285 = vset.pattern.permute.xlu0 0
    %286 = vperm.xlu0 %285, %v278
    %v287 = vpop.permute.xlu0 %286
    %v289 = vsub.f32 %v273, %v287
    %v290 = vmul.f32 %v289, 1.442695
    %v291 = vpow.pop %v290
    %292 = vadd.xlane.f32.xlu0 %v291
    %v293 = vpop.xlane.xlu0 %292
    %v294 = vadd.f32 %v283, %v293
    %vm295 = vcmask 7168
    %296 = vst.msk [vmem:[#allocation5] sm:$0xff] %vm295, %v294
    %297 = vst.msk [vmem:[#allocation4] sm:$0xff] %vm295, %v278
    %s298 = smul.u32 0, 8
    %s299 = scalar_lea.vmem [#allocation6], %s298
    %300 = vst [vmem:[%s299] sm:$0xff] %v273
    // Predicated region
    $region34: #{tpu_custom_call.1} parent=1 // pred_check
      %p301 = pneg %p40
    $region35: #{tpu_custom_call.1} parent=1 // pred_check_branch
      %303 = sbr.rel (%p301) target = $region37
    $region36: #{tpu_custom_call.1} parent=1 // pred_region
      %v304 = vld [vmem:[#allocation4] sm:$0xff]
      %v305 = vld [vmem:[#allocation5] sm:$0xff]
      %v306 = vlog2.pop %v305
      %v307 = vmul.f32 %v306, 0.6931472
      %v308 = vadd.f32 %v304, %v307
      %v309 = vld [vmem:[#allocation6] sm:$0xff]
      %311 = vset.pattern.permute.xlu0 0
      %312 = vperm.xlu0 %311, %v308
      %v313 = vpop.permute.xlu0 %312
      %v315 = vsub.f32 %v309, %v313
      %316 = vst [vmem:[#allocation10] sm:$0xff] %v315
    $region37: #{tpu_custom_call.1} parent=1 // pred_fallthru
      _
    // Predicated region
    $region38: #{tpu_custom_call.1} parent=1 // pred_check
      _
    $region39: #{tpu_custom_call.1} parent=1 // pred_check_branch
      %318 = sbr.rel (0) target = $region41
    $region40: #{tpu_custom_call.1} parent=1 // pred_region
      %320 = vsyncadd [#allocation9], 0
      %s322 = sshll.u32 [#allocation10], 4
      %s323 = int_to_ptr.vmem [resolvable:$true] %s322
      %s324 = sshll.u32 %s6, 4
      %s325 = int_to_ptr.hbm [resolvable:$true] %s324
      %327 = dma.vmem_to_hbm [thread:$0]  %s323, 128, %s325, [#allocation9]
    $region41: #{tpu_custom_call.1} parent=1 // pred_fallthru
      _
    // Predicated region
    $region42: #{tpu_custom_call.1} parent=1 // pred_check
      _
    $region43: #{tpu_custom_call.1} parent=1 // pred_check_branch
      %329 = sbr.rel (0) target = $region45
    $region44: #{tpu_custom_call.1} parent=1 // pred_region
      %331 = dma.done [#allocation9], 128
    $region45: #{tpu_custom_call.1} parent=1 // pred_fallthru
      _
    %332 = vsyncpa [#allocation8], 1
    %333 = vsyncpa [#allocation9], 1

// kernel: tpu_custom_call.1
$region0: #{tpu_custom_call.1}
  #allocation0 [shape = 'u32[]', space=smem, size = 0x4, offset = 0x4, fixed_abs, tag = 'smem constant byte address 0x4 - core index']
  #allocation1 [shape = 'u32[72,128]{1,0:T(1,128)}', space=vmem, size = 0x9000, scoped, tag = 'internal scratch']
  #allocation2 [shape = 'f32[8,128]{1,0:T(8,128)}', space=vmem, size = 0x1000, scoped, tag = 'scratch operand']
  #allocation3 [shape = 'f32[8,128]{1,0:T(8,128)}', space=vmem, size = 0x1000, scoped, tag = 'scratch operand']
  #allocation4 [shape = 'f32[8,1]{1,0:T(8,128)}', space=vmem, size = 0x1000, scoped, tag = 'scratch operand']
  #allocation5 [shape = 'f32[8,1]{1,0:T(8,128)}', space=vmem, size = 0x1000, scoped, tag = 'scratch operand']
  #allocation6 [shape = 'f32[1,8,128]{2,1,0:T(8,128)}', space=vmem, size = 0x1000, scoped, tag = 'scratch operand']
  %s0 = inlined_call_operand.vmem [shape: s32[8,4], index: 0, kind: input, shape index: {}]
  %s1 = inlined_call_operand.vmem [shape: f32[128,16], index: 1, kind: input, shape index: {}]
  %s2 = inlined_call_operand.vmem [shape: f32[128,128], index: 2, kind: input, shape index: {}]
  %s3 = inlined_call_operand.vmem [shape: f32[1,128], index: 3, kind: input, shape index: {}]
  %s4 = inlined_call_operand.hbm [shape: f32[128,128], index: 4, kind: input, shape index: {}]
  %s5 = inlined_call_operand.vmem [shape: f32[1,128], index: 5, kind: input, shape index: {}]
  %s6 = inlined_call_operand.hbm [shape: f32[8,128], index: 6, kind: output, shape index: {}]
  %s7 = sld [smem:[#allocation0]]
  $region46: #{tpu_custom_call.1} parent=0
    _
  %s9 = ssub.s32 1, %s7
  %s10 = scalar_select 0, %s9, %s7
  $region1: #{tpu_custom_call.1} parent=0
    #allocation7 [shape = 'u8[65536]{0}', space=vmem, size = 0x10000, scoped, tag = 'input window, operand 4, single buffered']
    #allocation8 [shape = 's32[1]{0}', space=sflag, size = 0x4, scoped, tag = 'scoped memory for tpu_custom_call.1']
    #allocation9 [shape = 's32[1]{0}', space=sflag, size = 0x4, scoped, tag = 'scoped memory for tpu_custom_call.1']
    #allocation10 [shape = 'u8[4096]{0}', space=vmem, size = 0x1000, scoped, tag = 'output window, operand 0, single buffered']
    %11 = vsyncpa [#allocation8], 0
    %12 = vsyncpa [#allocation9], 0
    // Predicated region
    $region2: #{tpu_custom_call.1} parent=1 // pred_check
      _
    $region3: #{tpu_custom_call.1} parent=1 // pred_check_branch
      %14 = sbr.rel (0) target = $region5
    $region4: #{tpu_custom_call.1} parent=1 // pred_region
      _
    $region5: #{tpu_custom_call.1} parent=1 // pred_fallthru
      _
    // Predicated region
    $region6: #{tpu_custom_call.1} parent=1 // pred_check
      _
    $region7: #{tpu_custom_call.1} parent=1 // pred_check_branch
      %16 = sbr.rel (0) target = $region9
    $region8: #{tpu_custom_call.1} parent=1 // pred_region
      _
    $region9: #{tpu_custom_call.1} parent=1 // pred_fallthru
      _
    // Predicated region
    $region10: #{tpu_custom_call.1} parent=1 // pred_check
      _
    $region11: #{tpu_custom_call.1} parent=1 // pred_check_branch
      %18 = sbr.rel (0) target = $region13
    $region12: #{tpu_custom_call.1} parent=1 // pred_region
      _
    $region13: #{tpu_custom_call.1} parent=1 // pred_fallthru
      _
    // Predicated region
    $region14: #{tpu_custom_call.1} parent=1 // pred_check
      _
    $region15: #{tpu_custom_call.1} parent=1 // pred_check_branch
      %20 = sbr.rel (0) target = $region17
    $region16: #{tpu_custom_call.1} parent=1 // pred_region
      _
    $region17: #{tpu_custom_call.1} parent=1 // pred_fallthru
      _
    // Predicated region
    $region18: #{tpu_custom_call.1} parent=1 // pred_check
      _
    $region19: #{tpu_custom_call.1} parent=1 // pred_check_branch
      %22 = sbr.rel (0) target = $region21
    $region20: #{tpu_custom_call.1} parent=1 // pred_region
      %24 = vsyncadd [#allocation8], 0
      %s25 = sshll.u32 %s4, 4
      %s26 = int_to_ptr.hbm [resolvable:$true] %s25
      %s27 = sshll.u32 [#allocation7], 4
      %s28 = int_to_ptr.vmem [resolvable:$true] %s27
      %33 = dma.hbm_to_vmem [thread:$0]  %s26, 2048, %s28, [#allocation8], 128, 128, 8
    $region21: #{tpu_custom_call.1} parent=1 // pred_fallthru
      _
    // Predicated region
    $region22: #{tpu_custom_call.1} parent=1 // pred_check
      _
    $region23: #{tpu_custom_call.1} parent=1 // pred_check_branch
      %35 = sbr.rel (0) target = $region25
    $region24: #{tpu_custom_call.1} parent=1 // pred_region
      _
    $region25: #{tpu_custom_call.1} parent=1 // pred_fallthru
      _
    // Predicated region
    $region26: #{tpu_custom_call.1} parent=1 // pred_check
      _
    $region27: #{tpu_custom_call.1} parent=1 // pred_check_branch
      %37 = sbr.rel (0) target = $region29
    $region28: #{tpu_custom_call.1} parent=1 // pred_region
      %39 = dma.done [#allocation8], 2048
    $region29: #{tpu_custom_call.1} parent=1 // pred_fallthru
      _
    %p40 = scmp.eq.s32.totalorder 0, 0
    // Predicated region
    $region30: #{tpu_custom_call.1} parent=1 // pred_check
      %p41 = pneg %p40
    $region31: #{tpu_custom_call.1} parent=1 // pred_check_branch
      %43 = sbr.rel (%p41) target = $region33
    $region32: #{tpu_custom_call.1} parent=1 // pred_region
      %44 = vst [vmem:[#allocation2] sm:$0xff] 0.0
      %v45 = vld [vmem:[%s1] sm:$0xff]
      %v46 = vld [vmem:[%s1 + $0x8] sm:$0xff]
      %v47 = vld [vmem:[%s1 + $0x10] sm:$0xff]
      %v48 = vld [vmem:[%s1 + $0x18] sm:$0xff]
      %v49 = vld [vmem:[%s1 + $0x20] sm:$0xff]
      %v50 = vld [vmem:[%s1 + $0x28] sm:$0xff]
      %v51 = vld [vmem:[%s1 + $0x30] sm:$0xff]
      %v52 = vld [vmem:[%s1 + $0x38] sm:$0xff]
      %v53 = vld [vmem:[%s1 + $0x40] sm:$0xff]
      %v54 = vld [vmem:[%s1 + $0x48] sm:$0xff]
      %v55 = vld [vmem:[%s1 + $0x50] sm:$0xff]
      %v56 = vld [vmem:[%s1 + $0x58] sm:$0xff]
      %v57 = vld [vmem:[%s1 + $0x60] sm:$0xff]
      %v58 = vld [vmem:[%s1 + $0x68] sm:$0xff]
      %v59 = vld [vmem:[%s1 + $0x70] sm:$0xff]
      %v60 = vld [vmem:[%s1 + $0x78] sm:$0xff]
      %v61 = vld [vmem:[%s0] sm:$0xff]
      %v62 = vlaneseq
      %v63 = vand.u32 %v62, 127
      %64 = vset.pattern.permute.xlu0 0
      %65 = vperm.xlu0 %64, %v61
      %v66 = vpop.permute.xlu0 %65
      %vm67 = vcmp.eq.s32.totalorder %v66, %v63
      %v68 = vsel %vm67, 1, 0
      %v69 = vcvt.s32.f32 %v68
      %70 = vmatpush.msra.mxu0 %v60
      %71 = vmatpush.msra.mxu0 %v59
      %72 = vmatpush.msra.mxu0 %v58
      %73 = vmatpush.msra.mxu0 %v57
      %74 = vmatpush.msra.mxu0 %v56
      %75 = vmatpush.msra.mxu0 %v55
      %76 = vmatpush.msra.mxu0 %v54
      %77 = vmatpush.msra.mxu0 %v53
      %78 = vmatpush.msra.mxu0 %v52
      %79 = vmatpush.msra.mxu0 %v51
      %80 = vmatpush.msra.mxu0 %v50
      %81 = vmatpush.msra.mxu0 %v49
      %82 = vmatpush.msra.mxu0 %v48
      %83 = vmatpush.msra.mxu0 %v47
      %84 = vmatpush.msra.mxu0 %v46
      %85 = vmatpush.msra.mxu0 %v45
      %86 = vmatmul.f32.gmra.mxu0 %v69
      %v87 = vpop.f32.mrf.mxu0
      %v88 = vadd.f32 0.0, %v87
      %89 = vdwg.mxu0
      %vm90 = vcmask 130048
      %91 = vst.msk [vmem:[#allocation2] sm:$0xff] %vm90, %v88
      %92 = vset.pattern.permute.xlu0 1
      %93 = vperm.xlu0 %92, %v61
      %v94 = vpop.permute.xlu0 %93
      %vm95 = vcmp.eq.s32.totalorder %v94, %v63
      %v96 = vsel %vm95, 1, 0
      %v97 = vcvt.s32.f32 %v96
      %98 = vmatpush.msra.mxu0 %v60
      %99 = vmatpush.msra.mxu0 %v59
      %100 = vmatpush.msra.mxu0 %v58
      %101 = vmatpush.msra.mxu0 %v57
      %102 = vmatpush.msra.mxu0 %v56
      %103 = vmatpush.msra.mxu0 %v55
      %104 = vmatpush.msra.mxu0 %v54
      %105 = vmatpush.msra.mxu0 %v53
      %106 = vmatpush.msra.mxu0 %v52
      %107 = vmatpush.msra.mxu0 %v51
      %108 = vmatpush.msra.mxu0 %v50
      %109 = vmatpush.msra.mxu0 %v49
      %110 = vmatpush.msra.mxu0 %v48
      %111 = vmatpush.msra.mxu0 %v47
      %112 = vmatpush.msra.mxu0 %v46
      %113 = vmatpush.msra.mxu0 %v45
      %114 = vmatmul.f32.gmra.mxu0 %v97
      %v115 = vpop.f32.mrf.mxu0
      %v116 = vadd.f32 0.0, %v115
      %117 = vdwg.mxu0
      %119 = vrot.lane.b32.xlu0 %v116, 16
      %v120 = vpop.permute.xlu0 %119
      %vm122 = vcmask 261248
      %123 = vst.msk [vmem:[#allocation2] sm:$0xff] %vm122, %v120
      %124 = vset.pattern.permute.xlu0 2
      %125 = vperm.xlu0 %124, %v61
      %v126 = vpop.permute.xlu0 %125
      %vm127 = vcmp.eq.s32.totalorder %v126, %v63
      %v128 = vsel %vm127, 1, 0
      %v129 = vcvt.s32.f32 %v128
      %130 = vmatpush.msra.mxu0 %v60
      %131 = vmatpush.msra.mxu0 %v59
      %132 = vmatpush.msra.mxu0 %v58
      %133 = vmatpush.msra.mxu0 %v57
      %134 = vmatpush.msra.mxu0 %v56
      %135 = vmatpush.msra.mxu0 %v55
      %136 = vmatpush.msra.mxu0 %v54
      %137 = vmatpush.msra.mxu0 %v53
      %138 = vmatpush.msra.mxu0 %v52
      %139 = vmatpush.msra.mxu0 %v51
      %140 = vmatpush.msra.mxu0 %v50
      %141 = vmatpush.msra.mxu0 %v49
      %142 = vmatpush.msra.mxu0 %v48
      %143 = vmatpush.msra.mxu0 %v47
      %144 = vmatpush.msra.mxu0 %v46
      %145 = vmatpush.msra.mxu0 %v45
      %146 = vmatmul.f32.gmra.mxu0 %v129
      %v147 = vpop.f32.mrf.mxu0
      %v148 = vadd.f32 0.0, %v147
      %149 = vdwg.mxu0
      %151 = vrot.lane.b32.xlu0 %v148, 32
      %v152 = vpop.permute.xlu0 %151
      %vm154 = vcmask 392448
      %155 = vst.msk [vmem:[#allocation2] sm:$0xff] %vm154, %v152
      %156 = vset.pattern.permute.xlu0 3
      %157 = vperm.xlu0 %156, %v61
      %v158 = vpop.permute.xlu0 %157
      %vm159 = vcmp.eq.s32.totalorder %v158, %v63
      %v160 = vsel %vm159, 1, 0
      %v161 = vcvt.s32.f32 %v160
      %162 = vmatpush.msra.mxu0 %v60
      %163 = vmatpush.msra.mxu0 %v59
      %164 = vmatpush.msra.mxu0 %v58
      %165 = vmatpush.msra.mxu0 %v57
      %166 = vmatpush.msra.mxu0 %v56
      %167 = vmatpush.msra.mxu0 %v55
      %168 = vmatpush.msra.mxu0 %v54
      %169 = vmatpush.msra.mxu0 %v53
      %170 = vmatpush.msra.mxu0 %v52
      %171 = vmatpush.msra.mxu0 %v51
      %172 = vmatpush.msra.mxu0 %v50
      %173 = vmatpush.msra.mxu0 %v49
      %174 = vmatpush.msra.mxu0 %v48
      %175 = vmatpush.msra.mxu0 %v47
      %176 = vmatpush.msra.mxu0 %v46
      %177 = vmatpush.msra.mxu0 %v45
      %178 = vmatmul.f32.gmra.mxu0 %v161
      %v179 = vpop.f32.mrf.mxu0
      %v180 = vadd.f32 0.0, %v179
      %181 = vdwg.mxu0
      %183 = vrot.lane.b32.xlu0 %v180, 48
      %v184 = vpop.permute.xlu0 %183
      %vm186 = vcmask 523648
      %187 = vst.msk [vmem:[#allocation2] sm:$0xff] %vm186, %v184
      %v188 = vld [vmem:[#allocation2] sm:$0xff]
      %v189 = vld [vmem:[%s2] sm:$0xff]
      %v190 = vld [vmem:[%s2 + $0x8] sm:$0xff]
      %v191 = vld [vmem:[%s2 + $0x10] sm:$0xff]
      %v192 = vld [vmem:[%s2 + $0x18] sm:$0xff]
      %v193 = vld [vmem:[%s2 + $0x20] sm:$0xff]
      %v194 = vld [vmem:[%s2 + $0x28] sm:$0xff]
      %v195 = vld [vmem:[%s2 + $0x30] sm:$0xff]
      %v196 = vld [vmem:[%s2 + $0x38] sm:$0xff]
      %v197 = vld [vmem:[%s2 + $0x40] sm:$0xff]
      %v198 = vld [vmem:[%s2 + $0x48] sm:$0xff]
      %v199 = vld [vmem:[%s2 + $0x50] sm:$0xff]
      %v200 = vld [vmem:[%s2 + $0x58] sm:$0xff]
      %v201 = vld [vmem:[%s2 + $0x60] sm:$0xff]
      %v202 = vld [vmem:[%s2 + $0x68] sm:$0xff]
      %v203 = vld [vmem:[%s2 + $0x70] sm:$0xff]
      %v204 = vld [vmem:[%s2 + $0x78] sm:$0xff]
      %v205 = vld [vmem:[%s3] sm:$0x1]
      %v207 = vperm.slane %v205, 0
      %209 = vmatpush.msra.mxu0 %v204
      %210 = vmatpush.msra.mxu0 %v203
      %211 = vmatpush.msra.mxu0 %v202
      %212 = vmatpush.msra.mxu0 %v201
      %213 = vmatpush.msra.mxu0 %v200
      %214 = vmatpush.msra.mxu0 %v199
      %215 = vmatpush.msra.mxu0 %v198
      %216 = vmatpush.msra.mxu0 %v197
      %217 = vmatpush.msra.mxu0 %v196
      %218 = vmatpush.msra.mxu0 %v195
      %219 = vmatpush.msra.mxu0 %v194
      %220 = vmatpush.msra.mxu0 %v193
      %221 = vmatpush.msra.mxu0 %v192
      %222 = vmatpush.msra.mxu0 %v191
      %223 = vmatpush.msra.mxu0 %v190
      %224 = vmatpush.msra.mxu0 %v189
      %225 = vmatmul.f32.gmra.mxu0 %v188
      %v226 = vpop.f32.mrf.mxu0
      %v227 = vadd.f32 %v207, %v226
      %228 = vdwg.mxu0
      %v229 = vmax.f32 %v227, 0.0
      %230 = vst [vmem:[#allocation3] sm:$0xff] %v229
      %vm231 = vcmask 7168
      %232 = vst.msk [vmem:[#allocation4] sm:$0xff] %vm231, -inf
      %233 = vst.msk [vmem:[#allocation5] sm:$0xff] %vm231, 0.0
    $region33: #{tpu_custom_call.1} parent=1 // pred_fallthru
      _
    %v234 = vld [vmem:[#allocation3] sm:$0xff]
    %v235 = vld [vmem:[#allocation7] sm:$0xff]
    %v236 = vld [vmem:[#allocation7 + $0x8] sm:$0xff]
    %v237 = vld [vmem:[#allocation7 + $0x10] sm:$0xff]
    %v238 = vld [vmem:[#allocation7 + $0x18] sm:$0xff]
    %v239 = vld [vmem:[#allocation7 + $0x20] sm:$0xff]
    %v240 = vld [vmem:[#allocation7 + $0x28] sm:$0xff]
    %v241 = vld [vmem:[#allocation7 + $0x30] sm:$0xff]
    %v242 = vld [vmem:[#allocation7 + $0x38] sm:$0xff]
    %v243 = vld [vmem:[#allocation7 + $0x40] sm:$0xff]
    %v244 = vld [vmem:[#allocation7 + $0x48] sm:$0xff]
    %v245 = vld [vmem:[#allocation7 + $0x50] sm:$0xff]
    %v246 = vld [vmem:[#allocation7 + $0x58] sm:$0xff]
    %v247 = vld [vmem:[#allocation7 + $0x60] sm:$0xff]
    %v248 = vld [vmem:[#allocation7 + $0x68] sm:$0xff]
    %v249 = vld [vmem:[#allocation7 + $0x70] sm:$0xff]
    %v250 = vld [vmem:[#allocation7 + $0x78] sm:$0xff]
    %v251 = vld [vmem:[%s5] sm:$0x1]
    %v253 = vperm.slane %v251, 0
    %255 = vmatpush.msra.mxu0 %v250
    %256 = vmatpush.msra.mxu0 %v249
    %257 = vmatpush.msra.mxu0 %v248
    %258 = vmatpush.msra.mxu0 %v247
    %259 = vmatpush.msra.mxu0 %v246
    %260 = vmatpush.msra.mxu0 %v245
    %261 = vmatpush.msra.mxu0 %v244
    %262 = vmatpush.msra.mxu0 %v243
    %263 = vmatpush.msra.mxu0 %v242
    %264 = vmatpush.msra.mxu0 %v241
    %265 = vmatpush.msra.mxu0 %v240
    %266 = vmatpush.msra.mxu0 %v239
    %267 = vmatpush.msra.mxu0 %v238
    %268 = vmatpush.msra.mxu0 %v237
    %269 = vmatpush.msra.mxu0 %v236
    %270 = vmatpush.msra.mxu0 %v235
    %271 = vmatmul.f32.gmra.mxu0 %v234
    %v272 = vpop.f32.mrf.mxu0
    %v273 = vadd.f32 %v253, %v272
    %274 = vdwg.mxu0
    %v275 = vld [vmem:[#allocation4] sm:$0xff]
    %276 = vmax.xlane.f32.xlu0 %v273
    %v277 = vpop.xlane.xlu0 %276
    %v278 = vmax.f32 %v275, %v277
    %v279 = vld [vmem:[#allocation5] sm:$0xff]
    %v280 = vsub.f32 %v275, %v278
    %v281 = vmul.f32 %v280, 1.442695
    %v282 = vpow.pop %v281
    %v283 = vmul.f32 %v279, %v282
    %285 = vset.pattern.permute.xlu0 0
    %286 = vperm.xlu0 %285, %v278
    %v287 = vpop.permute.xlu0 %286
    %v289 = vsub.f32 %v273, %v287
    %v290 = vmul.f32 %v289, 1.442695
    %v291 = vpow.pop %v290
    %292 = vadd.xlane.f32.xlu0 %v291
    %v293 = vpop.xlane.xlu0 %292
    %v294 = vadd.f32 %v283, %v293
    %vm295 = vcmask 7168
    %296 = vst.msk [vmem:[#allocation5] sm:$0xff] %vm295, %v294
    %297 = vst.msk [vmem:[#allocation4] sm:$0xff] %vm295, %v278
    %s298 = smul.u32 0, 8
    %s299 = scalar_lea.vmem [#allocation6], %s298
    %300 = vst [vmem:[%s299] sm:$0xff] %v273
    // Predicated region
    $region34: #{tpu_custom_call.1} parent=1 // pred_check
      %p301 = pneg %p40
    $region35: #{tpu_custom_call.1} parent=1 // pred_check_branch
      %303 = sbr.rel (%p301) target = $region37
    $region36: #{tpu_custom_call.1} parent=1 // pred_region
      %v304 = vld [vmem:[#allocation4] sm:$0xff]
      %v305 = vld [vmem:[#allocation5] sm:$0xff]
      %v306 = vlog2.pop %v305
      %v307 = vmul.f32 %v306, 0.6931472
      %v308 = vadd.f32 %v304, %v307
      %v309 = vld [vmem:[#allocation6] sm:$0xff]
      %311 = vset.pattern.permute.xlu0 0
      %312 = vperm.xlu0 %311, %v308
      %v313 = vpop.permute.xlu0 %312
      %v315 = vsub.f32 %v309, %v313
      %316 = vst [vmem:[#allocation10] sm:$0xff] %v315
    $region37: #{tpu_custom_call.1} parent=1 // pred_fallthru
      _
    // Predicated region
    $region38: #{tpu_custom_call.1} parent=1 // pred_check
      _
    $region39: #{tpu_custom_call.1} parent=1 // pred_check_branch
      %318 = sbr.rel (0) target = $region41
    $region40: #{tpu_custom_call.1} parent=1 // pred_region
      %320 = vsyncadd [#allocation9], 0
      %s322 = sshll.u32 [#allocation10], 4
      %s323 = int_to_ptr.vmem [resolvable:$true] %s322
      %s324 = sshll.u32 %s6, 4
      %s325 = int_to_ptr.hbm [resolvable:$true] %s324
      %327 = dma.vmem_to_hbm [thread:$0]  %s323, 128, %s325, [#allocation9]
    $region41: #{tpu_custom_call.1} parent=1 // pred_fallthru
      _
    // Predicated region
    $region42: #{tpu_custom_call.1} parent=1 // pred_check
      _
    $region43: #{tpu_custom_call.1} parent=1 // pred_check_branch
      %329 = sbr.rel (0) target = $region45
    $region44: #{tpu_custom_call.1} parent=1 // pred_region
      %331 = dma.done [#allocation9], 128
    $region45: #{tpu_custom_call.1} parent=1 // pred_fallthru
      _
    %332 = vsyncpa [#allocation8], 1
    %333 = vsyncpa [#allocation9], 1

</llo_original>
